<compile_context>
chip_gen: v7x
topology: tpu7x:2x2x1
jax: 0.10.0
libtpu: 0.0.40
codegen_flags: <defaults>
</compile_context>

<pallas_src>
import functools

import jax
import jax.numpy as jnp
import numpy as np
from jax.experimental import pallas as pl
from jax.experimental.pallas import tpu as pltpu

BN_EPS = 1e-3


def _vmem_limit_bytes():
    """Generation-aware scoped-VMEM budget: half of physical VMEM, capped."""
    try:
        cap = int(pltpu.get_tpu_info().vmem_capacity_bytes)
    except Exception:                      # query unavailable -> conservative
        cap = 64 * 1024 * 1024
    return max(16 * 1024 * 1024, min(cap // 2, 64 * 1024 * 1024))


# -----------------------------------------------------------------------------
# Fused kernel (one grid step = one sample, channel-major / lane-dense layout)
#   x_ref   : (1, C, H*W)   input sample, flattened NCHW (f32)
#   dwt_ref : (C, 9)        depthwise 3x3 weights, channel-major / tap-minor
#   pwt_ref : (Cout, C)     pointwise weights, BN scale folded, transposed, bf16
#   b_ref   : (Cout, 1)     folded (pointwise bias + eval-BN) bias, f32
#   em_ref  : (2, H*W)      lane masks: row0 kills w==0 (kw=0 taps),
#                                       row1 kills w==W-1 (kw=2 taps)
#   o_ref   : (1, Cout, H*W) f32 output (already NCHW-ordered)
#   pad_ref : (C, (H+2)*W + 8) VMEM scratch: zero halo + image at lane W+1
# -----------------------------------------------------------------------------
def _sepconv_kernel(x_ref, dwt_ref, pwt_ref, b_ref, em_ref, o_ref, pad_ref,
                    *, H, W, C, act):
    HW = H * W
    OFF = W + 1                       # image starts at this lane of the slab
    padw = pad_ref.shape[1]

    # build the zero-padded halo slab in VMEM (once per sample, no HBM pad)
    pad_ref[:, :OFF] = jnp.zeros((C, OFF), jnp.float32)
    pad_ref[:, OFF + HW:padw] = jnp.zeros((C, padw - OFF - HW), jnp.float32)
    pad_ref[:, OFF:OFF + HW] = x_ref[0].astype(jnp.float32)

    dwt = dwt_ref[...]                # (C, 9)  loaded once
    em = em_ref[...]                  # (2, HW) loaded once

    # depthwise 3x3: nine statically lane-shifted, fully lane-dense taps.
    # Tap (kh, kw) for output pixel m = h*W + w reads slab lane  m + kh*W + kw.
    acc = jnp.zeros((C, HW), jnp.float32)
    for t in range(9):
        kh, kw = divmod(t, 3)
        off = kh * W + kw
        tap = pad_ref[:, off:off + HW]            # (C, HW), static slice
        if kw == 0:                               # w==0 reads prev row -> mask
            tap = tap * em[0:1, :]
        elif kw == 2:                             # w==W-1 reads next row -> mask
            tap = tap * em[1:2, :]
        acc = acc + tap * dwt[:, t:t + 1]         # per-channel weight (sublane)

    # pointwise 1x1 (+ folded BN scale) on the MXU: bf16 operands, f32 acc.
    y = jnp.dot(pwt_ref[...], acc.astype(pwt_ref.dtype),
                preferred_element_type=jnp.float32)        # (Cout, HW)
    y = y + b_ref[...]                                      # bias-only epilogue
    if act:                                                 # MemoryEfficientSwish
        y = y * jax.nn.sigmoid(y)
    o_ref[...] = y[None].astype(o_ref.dtype)                # lane-dense store


def _sepconv_pallas(x_flat, dwt, pwt, bias, edge_mask, *, H, W, act):
    """x_flat: (N, C, H*W) flattened NCHW input; returns (N, Cout, H*W)."""
    N, C, HW = x_flat.shape
    Cout = pwt.shape[0]
    padw = (H + 2) * W + 8
    return pl.pallas_call(
        functools.partial(_sepconv_kernel, H=H, W=W, C=C, act=act),
        out_shape=jax.ShapeDtypeStruct((N, Cout, HW), jnp.float32),
        grid_spec=pltpu.PrefetchScalarGridSpec(
            num_scalar_prefetch=0,
            grid=(N,),
            in_specs=[
                pl.BlockSpec((1, C, HW), lambda n: (n, 0, 0)),
                pl.BlockSpec((C, 9), lambda n: (0, 0)),
                pl.BlockSpec((Cout, C), lambda n: (0, 0)),
                pl.BlockSpec((Cout, 1), lambda n: (0, 0)),
                pl.BlockSpec((2, HW), lambda n: (0, 0)),
            ],
            out_specs=pl.BlockSpec((1, Cout, HW), lambda n: (n, 0, 0)),
            scratch_shapes=[pltpu.VMEM((C, padw), jnp.float32)],
        ),
        compiler_params=pltpu.CompilerParams(
            dimension_semantics=("parallel",),      # samples split over v7x's 2 TCs
            vmem_limit_bytes=_vmem_limit_bytes()),
    )(x_flat, dwt, pwt, bias, edge_mask)


# -----------------------------------------------------------------------------
# Module forward (NCHW in / NCHW out, matching the PyTorch reference)
# -----------------------------------------------------------------------------
def separable_conv_block(params, x_nchw, *, norm=True, activation=False,
                         matmul_dtype=jnp.bfloat16):
    N, C, H, W = x_nchw.shape
    Cout = params["pw_w"].shape[1]

    # fold pointwise bias + eval-mode BatchNorm:  y = dw @ (pw*s) + (beta+(b-mu)*s)
    if norm:
        scale = params["gamma"] / jnp.sqrt(params["var"] + BN_EPS)
        bias = params["beta"] + (params["pw_b"] - params["mean"]) * scale
    else:
        scale = jnp.ones((Cout,), jnp.float32)
        bias = params["pw_b"]
    pwt = (params["pw_w"] * scale[None, :]).T.astype(matmul_dtype)   # (Cout, C)
    bias = bias.astype(jnp.float32).reshape(Cout, 1)
    dwt = params["dw_w"].reshape(9, C).T.astype(jnp.float32)         # (C, 9)

    # left/right SAME-padding lane masks (compile-time constants)
    w_idx = np.arange(H * W) % W
    edge_mask = jnp.asarray(
        np.stack([(w_idx != 0), (w_idx != W - 1)]).astype(np.float32))  # (2, HW)

    # NCHW -> (N, C, H*W) is a pure reshape: zero wrapper-side HBM preprocessing
    # (no transpose, no jnp.pad, no dtype-cast pass).
    x_flat = x_nchw.astype(jnp.float32).reshape(N, C, H * W)

    y = _sepconv_pallas(x_flat, dwt, pwt, bias, edge_mask,
                        H=H, W=W, act=activation)
    return y.reshape(N, Cout, H, W)                                   # NCHW


# -----------------------------------------------------------------------------
# Parameter init + pure-JAX reference (eval semantics) for validation
# -----------------------------------------------------------------------------
def init_params(key, in_channels, out_channels=None):
    if out_channels is None:
        out_channels = in_channels
    k0, k1, k2, k3, k4, k5, k6 = jax.random.split(key, 7)
    return dict(
        dw_w=0.25 * jax.random.normal(k0, (3, 3, in_channels), jnp.float32),
        pw_w=(1.0 / np.sqrt(in_channels))
        * jax.random.normal(k1, (in_channels, out_channels), jnp.float32),
        pw_b=0.05 * jax.random.normal(k2, (out_channels,), jnp.float32),
        gamma=1.0 + 0.1 * jax.random.normal(k3, (out_channels,), jnp.float32),
        beta=0.1 * jax.random.normal(k4, (out_channels,), jnp.float32),
        mean=0.1 * jax.random.normal(k5, (out_channels,), jnp.float32),
        var=1.0 + 0.1 * jax.random.uniform(k6, (out_channels,), jnp.float32),
    )


def reference_forward(params, x_nchw, *, norm=True, activation=False):
    # TODO(synk): BatchNorm training-mode running-stat updates are out of scope
    # (eval-mode BN only, as folded into the Pallas kernel's pointwise weights).
    x = jnp.transpose(x_nchw, (0, 2, 3, 1)).astype(jnp.float32)
    C = x.shape[-1]
    dw_hwio = params["dw_w"][:, :, None, :]                   # (3, 3, 1, C)
    y = jax.lax.conv_general_dilated(
        x, dw_hwio, window_strides=(1, 1), padding=((1, 1), (1, 1)),
        dimension_numbers=("NHWC", "HWIO", "NHWC"), feature_group_count=C)
    y = jnp.einsum("nhwc,cd->nhwd", y, params["pw_w"]) + params["pw_b"]
    if norm:
        y = (y - params["mean"]) / jnp.sqrt(params["var"] + BN_EPS) \
            * params["gamma"] + params["beta"]
    if activation:
        y = y * jax.nn.sigmoid(y)
    return jnp.transpose(y, (0, 3, 1, 2))


# -----------------------------------------------------------------------------
if __name__ == "__main__":
    key = jax.random.PRNGKey(0)
    kx, kp1, kp2 = jax.random.split(key, 3)
    # NCHW input, BiFPN-like channel count (24) at a small spatial size
    x = jax.random.normal(kx, (2, 24, 24, 32), jnp.float32)

    # Block 1: module defaults (norm=True, activation=False, out = in = 24)
    p1 = init_params(kp1, 24)
    fwd1 = jax.jit(functools.partial(separable_conv_block,
                                     norm=True, activation=False))
    out1 = jax.block_until_ready(fwd1(p1, x))
    ref1 = reference_forward(p1, x, norm=True, activation=False)

    # Block 2: different out_channels + swish activation path
    p2 = init_params(kp2, 24, 40)
    fwd2 = jax.jit(functools.partial(separable_conv_block,
                                     norm=True, activation=True))
    out2 = jax.block_until_ready(fwd2(p2, x))
    ref2 = reference_forward(p2, x, norm=True, activation=True)

    assert out1.shape == (2, 24, 24, 32), out1.shape
    assert out2.shape == (2, 40, 24, 32), out2.shape
    err1 = float(jnp.max(jnp.abs(out1 - ref1)))
    err2 = float(jnp.max(jnp.abs(out2 - ref2)))
    assert np.isfinite(err1) and err1 < 8e-2, ("mismatch (default cfg)", err1)
    assert np.isfinite(err2) and err2 < 8e-2, ("mismatch (act cfg)", err2)
    print("KERNEL_OK")
</pallas_src>

<mosaic_0001>
module attributes {stable_mosaic.version = 11 : i64} {
  func.func @_sepconv_kernel(%arg0: i32, %arg1: memref<1x24x768xf32, #tpu.memory_space<vmem>>, %arg2: memref<24x9xf32, #tpu.memory_space<vmem>>, %arg3: memref<24x24xbf16, #tpu.memory_space<vmem>>, %arg4: memref<24x1xf32, #tpu.memory_space<vmem>>, %arg5: memref<2x768xf32, #tpu.memory_space<vmem>>, %arg6: memref<1x24x768xf32, #tpu.memory_space<vmem>>, %arg7: memref<24x840xf32, #tpu.memory_space<vmem>>) attributes {dimension_semantics = [#tpu.dimension_semantics<parallel>], iteration_bounds = array<i64: 2>, scalar_prefetch = 0 : i64, scratch_operands = 1 : i64, tpu.core_type = #tpu.core_type<tc>, window_params = [{transform_indices = @transform_0, window_bounds = array<i64: 1, 24, 768>}, {pipeline_mode = #tpu.pipeline_mode<synchronous>, transform_indices = @transform_1, window_bounds = array<i64: 24, 9>}, {pipeline_mode = #tpu.pipeline_mode<synchronous>, transform_indices = @transform_2, window_bounds = array<i64: 24, 24>}, {pipeline_mode = #tpu.pipeline_mode<synchronous>, transform_indices = @transform_3, window_bounds = array<i64: 24, 1>}, {pipeline_mode = #tpu.pipeline_mode<synchronous>, transform_indices = @transform_4, window_bounds = array<i64: 2, 768>}, {transform_indices = @transform_5, window_bounds = array<i64: 1, 24, 768>}]} {
    %cst = arith.constant 0.000000e+00 : f32
    %0 = vector.broadcast %cst : f32 to vector<24x33xf32>
    %c0 = arith.constant 0 : index
    %c0_0 = arith.constant 0 : index
    %1 = vector.load %arg7[%c0, %c0_0] : memref<24x840xf32, #tpu.memory_space<vmem>>, vector<24x33xf32>
    tpu.vector_store %arg7[%c0, %c0_0], %0 {strides = array<i32>} : memref<24x840xf32, #tpu.memory_space<vmem>>, vector<24x33xf32>,
    %cst_1 = arith.constant 0.000000e+00 : f32
    %2 = vector.broadcast %cst_1 : f32 to vector<24x39xf32>
    %c0_2 = arith.constant 0 : index
    %c801 = arith.constant 801 : index
    %3 = vector.load %arg7[%c0_2, %c801] : memref<24x840xf32, #tpu.memory_space<vmem>>, vector<24x39xf32>
    tpu.vector_store %arg7[%c0_2, %c801], %2 {strides = array<i32>} : memref<24x840xf32, #tpu.memory_space<vmem>>, vector<24x39xf32>,
    %c0_3 = arith.constant 0 : index
    %c0_4 = arith.constant 0 : index
    %c0_5 = arith.constant 0 : index
    %4 = vector.load %arg1[%c0_3, %c0_4, %c0_5] : memref<1x24x768xf32, #tpu.memory_space<vmem>>, vector<1x24x768xf32>
    %5 = vector.shape_cast %4 : vector<1x24x768xf32> to vector<24x768xf32>
    %c0_6 = arith.constant 0 : index
    %c33 = arith.constant 33 : index
    %6 = vector.load %arg7[%c0_6, %c33] : memref<24x840xf32, #tpu.memory_space<vmem>>, vector<24x768xf32>
    tpu.vector_store %arg7[%c0_6, %c33], %5 {strides = array<i32>} : memref<24x840xf32, #tpu.memory_space<vmem>>, vector<24x768xf32>,
    %c0_7 = arith.constant 0 : index
    %c0_8 = arith.constant 0 : index
    %7 = vector.load %arg2[%c0_7, %c0_8] : memref<24x9xf32, #tpu.memory_space<vmem>>, vector<24x9xf32>
    %c0_9 = arith.constant 0 : index
    %c0_10 = arith.constant 0 : index
    %8 = vector.load %arg5[%c0_9, %c0_10] : memref<2x768xf32, #tpu.memory_space<vmem>>, vector<2x768xf32>
    %cst_11 = arith.constant 0.000000e+00 : f32
    %9 = vector.broadcast %cst_11 : f32 to vector<24x768xf32>
    %c0_12 = arith.constant 0 : index
    %c0_13 = arith.constant 0 : index
    %10 = vector.load %arg7[%c0_12, %c0_13] : memref<24x840xf32, #tpu.memory_space<vmem>>, vector<24x768xf32>
    %11 = vector.extract_strided_slice %8 {offsets = [0, 0], sizes = [1, 768], strides = [1, 1]} : vector<2x768xf32> to vector<1x768xf32>
    %12 = vector.broadcast %11 : vector<1x768xf32> to vector<24x768xf32>
    %13 = arith.mulf %10, %12 : vector<24x768xf32>
    %14 = vector.extract_strided_slice %7 {offsets = [0, 0], sizes = [24, 1], strides = [1, 1]} : vector<24x9xf32> to vector<24x1xf32>
    %15 = vector.broadcast %14 : vector<24x1xf32> to vector<24x768xf32>
    %16 = arith.mulf %13, %15 : vector<24x768xf32>
    %17 = arith.addf %9, %16 : vector<24x768xf32>
    %c0_14 = arith.constant 0 : index
    %c1 = arith.constant 1 : index
    %18 = vector.load %arg7[%c0_14, %c1] : memref<24x840xf32, #tpu.memory_space<vmem>>, vector<24x768xf32>
    %19 = vector.extract_strided_slice %7 {offsets = [0, 1], sizes = [24, 1], strides = [1, 1]} : vector<24x9xf32> to vector<24x1xf32>
    %20 = vector.broadcast %19 : vector<24x1xf32> to vector<24x768xf32>
    %21 = arith.mulf %18, %20 : vector<24x768xf32>
    %22 = arith.addf %17, %21 : vector<24x768xf32>
    %c0_15 = arith.constant 0 : index
    %c2 = arith.constant 2 : index
    %23 = vector.load %arg7[%c0_15, %c2] : memref<24x840xf32, #tpu.memory_space<vmem>>, vector<24x768xf32>
    %24 = vector.extract_strided_slice %8 {offsets = [1, 0], sizes = [1, 768], strides = [1, 1]} : vector<2x768xf32> to vector<1x768xf32>
    %25 = vector.broadcast %24 : vector<1x768xf32> to vector<24x768xf32>
    %26 = arith.mulf %23, %25 : vector<24x768xf32>
    %27 = vector.extract_strided_slice %7 {offsets = [0, 2], sizes = [24, 1], strides = [1, 1]} : vector<24x9xf32> to vector<24x1xf32>
    %28 = vector.broadcast %27 : vector<24x1xf32> to vector<24x768xf32>
    %29 = arith.mulf %26, %28 : vector<24x768xf32>
    %30 = arith.addf %22, %29 : vector<24x768xf32>
    %c0_16 = arith.constant 0 : index
    %c32 = arith.constant 32 : index
    %31 = vector.load %arg7[%c0_16, %c32] : memref<24x840xf32, #tpu.memory_space<vmem>>, vector<24x768xf32>
    %32 = vector.extract_strided_slice %8 {offsets = [0, 0], sizes = [1, 768], strides = [1, 1]} : vector<2x768xf32> to vector<1x768xf32>
    %33 = vector.broadcast %32 : vector<1x768xf32> to vector<24x768xf32>
    %34 = arith.mulf %31, %33 : vector<24x768xf32>
    %35 = vector.extract_strided_slice %7 {offsets = [0, 3], sizes = [24, 1], strides = [1, 1]} : vector<24x9xf32> to vector<24x1xf32>
    %36 = vector.broadcast %35 : vector<24x1xf32> to vector<24x768xf32>
    %37 = arith.mulf %34, %36 : vector<24x768xf32>
    %38 = arith.addf %30, %37 : vector<24x768xf32>
    %c0_17 = arith.constant 0 : index
    %c33_18 = arith.constant 33 : index
    %39 = vector.load %arg7[%c0_17, %c33_18] : memref<24x840xf32, #tpu.memory_space<vmem>>, vector<24x768xf32>
    %40 = vector.extract_strided_slice %7 {offsets = [0, 4], sizes = [24, 1], strides = [1, 1]} : vector<24x9xf32> to vector<24x1xf32>
    %41 = vector.broadcast %40 : vector<24x1xf32> to vector<24x768xf32>
    %42 = arith.mulf %39, %41 : vector<24x768xf32>
    %43 = arith.addf %38, %42 : vector<24x768xf32>
    %c0_19 = arith.constant 0 : index
    %c34 = arith.constant 34 : index
    %44 = vector.load %arg7[%c0_19, %c34] : memref<24x840xf32, #tpu.memory_space<vmem>>, vector<24x768xf32>
    %45 = vector.extract_strided_slice %8 {offsets = [1, 0], sizes = [1, 768], strides = [1, 1]} : vector<2x768xf32> to vector<1x768xf32>
    %46 = vector.broadcast %45 : vector<1x768xf32> to vector<24x768xf32>
    %47 = arith.mulf %44, %46 : vector<24x768xf32>
    %48 = vector.extract_strided_slice %7 {offsets = [0, 5], sizes = [24, 1], strides = [1, 1]} : vector<24x9xf32> to vector<24x1xf32>
    %49 = vector.broadcast %48 : vector<24x1xf32> to vector<24x768xf32>
    %50 = arith.mulf %47, %49 : vector<24x768xf32>
    %51 = arith.addf %43, %50 : vector<24x768xf32>
    %c0_20 = arith.constant 0 : index
    %c64 = arith.constant 64 : index
    %52 = vector.load %arg7[%c0_20, %c64] : memref<24x840xf32, #tpu.memory_space<vmem>>, vector<24x768xf32>
    %53 = vector.extract_strided_slice %8 {offsets = [0, 0], sizes = [1, 768], strides = [1, 1]} : vector<2x768xf32> to vector<1x768xf32>
    %54 = vector.broadcast %53 : vector<1x768xf32> to vector<24x768xf32>
    %55 = arith.mulf %52, %54 : vector<24x768xf32>
    %56 = vector.extract_strided_slice %7 {offsets = [0, 6], sizes = [24, 1], strides = [1, 1]} : vector<24x9xf32> to vector<24x1xf32>
    %57 = vector.broadcast %56 : vector<24x1xf32> to vector<24x768xf32>
    %58 = arith.mulf %55, %57 : vector<24x768xf32>
    %59 = arith.addf %51, %58 : vector<24x768xf32>
    %c0_21 = arith.constant 0 : index
    %c65 = arith.constant 65 : index
    %60 = vector.load %arg7[%c0_21, %c65] : memref<24x840xf32, #tpu.memory_space<vmem>>, vector<24x768xf32>
    %61 = vector.extract_strided_slice %7 {offsets = [0, 7], sizes = [24, 1], strides = [1, 1]} : vector<24x9xf32> to vector<24x1xf32>
    %62 = vector.broadcast %61 : vector<24x1xf32> to vector<24x768xf32>
    %63 = arith.mulf %60, %62 : vector<24x768xf32>
    %64 = arith.addf %59, %63 : vector<24x768xf32>
    %c0_22 = arith.constant 0 : index
    %c66 = arith.constant 66 : index
    %65 = vector.load %arg7[%c0_22, %c66] : memref<24x840xf32, #tpu.memory_space<vmem>>, vector<24x768xf32>
    %66 = vector.extract_strided_slice %8 {offsets = [1, 0], sizes = [1, 768], strides = [1, 1]} : vector<2x768xf32> to vector<1x768xf32>
    %67 = vector.broadcast %66 : vector<1x768xf32> to vector<24x768xf32>
    %68 = arith.mulf %65, %67 : vector<24x768xf32>
    %69 = vector.extract_strided_slice %7 {offsets = [0, 8], sizes = [24, 1], strides = [1, 1]} : vector<24x9xf32> to vector<24x1xf32>
    %70 = vector.broadcast %69 : vector<24x1xf32> to vector<24x768xf32>
    %71 = arith.mulf %68, %70 : vector<24x768xf32>
    %72 = arith.addf %64, %71 : vector<24x768xf32>
    %c0_23 = arith.constant 0 : index
    %c0_24 = arith.constant 0 : index
    %73 = vector.load %arg3[%c0_23, %c0_24] : memref<24x24xbf16, #tpu.memory_space<vmem>>, vector<24x24xbf16>
    %74 = arith.truncf %72 : vector<24x768xf32> to vector<24x768xbf16>
    %cst_25 = arith.constant dense<0.000000e+00> : vector<24x768xf32>
    %75 = tpu.matmul %73, %74, %cst_25 {dimension_numbers = #tpu.dot_dimension_numbers<[1], [0], [0], [1], [0, 0, 1, 1], [], []>} : vector<24x24xbf16>, vector<24x768xbf16>, vector<24x768xf32> -> vector<24x768xf32>
    %c0_26 = arith.constant 0 : index
    %c0_27 = arith.constant 0 : index
    %76 = vector.load %arg4[%c0_26, %c0_27] : memref<24x1xf32, #tpu.memory_space<vmem>>, vector<24x1xf32>
    %77 = vector.broadcast %76 : vector<24x1xf32> to vector<24x768xf32>
    %78 = arith.addf %75, %77 : vector<24x768xf32>
    %79 = vector.shape_cast %78 : vector<24x768xf32> to vector<1x24x768xf32>
    %c0_28 = arith.constant 0 : index
    %c0_29 = arith.constant 0 : index
    %c0_30 = arith.constant 0 : index
    %80 = vector.load %arg6[%c0_28, %c0_29, %c0_30] : memref<1x24x768xf32, #tpu.memory_space<vmem>>, vector<1x24x768xf32>
    tpu.vector_store %arg6[%c0_28, %c0_29, %c0_30], %79 {strides = array<i32>} : memref<1x24x768xf32, #tpu.memory_space<vmem>>, vector<1x24x768xf32>,
    return
  }
  func.func @transform_0(%arg0: i32) -> (i32, i32, i32) {
    %c0_i32 = arith.constant 0 : i32
    %c0_i32_0 = arith.constant 0 : i32
    %c0_i32_1 = arith.constant 0 : i32
    return %arg0, %c0_i32, %c0_i32_0 : i32, i32, i32
  }
  func.func @transform_1(%arg0: i32) -> (i32, i32) {
    %c0_i32 = arith.constant 0 : i32
    %c0_i32_0 = arith.constant 0 : i32
    %c0_i32_1 = arith.constant 0 : i32
    return %c0_i32, %c0_i32_0 : i32, i32
  }
  func.func @transform_2(%arg0: i32) -> (i32, i32) {
    %c0_i32 = arith.constant 0 : i32
    %c0_i32_0 = arith.constant 0 : i32
    %c0_i32_1 = arith.constant 0 : i32
    return %c0_i32, %c0_i32_0 : i32, i32
  }
  func.func @transform_3(%arg0: i32) -> (i32, i32) {
    %c0_i32 = arith.constant 0 : i32
    %c0_i32_0 = arith.constant 0 : i32
    %c0_i32_1 = arith.constant 0 : i32
    return %c0_i32, %c0_i32_0 : i32, i32
  }
  func.func @transform_4(%arg0: i32) -> (i32, i32) {
    %c0_i32 = arith.constant 0 : i32
    %c0_i32_0 = arith.constant 0 : i32
    %c0_i32_1 = arith.constant 0 : i32
    return %c0_i32, %c0_i32_0 : i32, i32
  }
  func.func @transform_5(%arg0: i32) -> (i32, i32, i32) {
    %c0_i32 = arith.constant 0 : i32
    %c0_i32_0 = arith.constant 0 : i32
    %c0_i32_1 = arith.constant 0 : i32
    return %arg0, %c0_i32, %c0_i32_0 : i32, i32, i32
  }
}

</mosaic_0001>

<llo_original>
// kernel: separable_conv_block.1
$region0: #{separable_conv_block.1}
  #allocation0 [shape = 'u32[]', space=smem, size = 0x4, offset = 0x4, fixed_abs, tag = 'smem constant byte address 0x4 - core index']
  #allocation1 [shape = 'u32[144,128]{1,0:T(1,128)}', space=vmem, size = 0x12000, scoped, tag = 'internal scratch']
  #allocation2 [shape = 'f32[24,840]{1,0:T(8,128)}', space=vmem, size = 0x15000, scoped, tag = 'scratch operand']
  %s0 = inlined_call_operand.vmem [shape: f32[2,24,768], index: 0, kind: input, shape index: {}]
  %s1 = inlined_call_operand.vmem [shape: f32[24,9], index: 1, kind: input, shape index: {}]
  %s2 = inlined_call_operand.vmem [shape: bf16[24,24], index: 2, kind: input, shape index: {}]
  %s3 = inlined_call_operand.vmem [shape: f32[24,1], index: 3, kind: input, shape index: {}]
  %s4 = inlined_call_operand.vmem [shape: f32[2,768], index: 4, kind: input, shape index: {}]
  %s5 = inlined_call_operand.vmem [shape: f32[2,24,768], index: 5, kind: output, shape index: {}]
  %s6 = sld [smem:[#allocation0]]
  $region53: #{separable_conv_block.1} parent=0
    _
  %s8 = ssub.s32 1, %s6
  %s9 = scalar_select 0, %s8, %s6
  loop: start=0, step=1, limit=4
  $region2: #{separable_conv_block.1} parent=0 // loop_pre_header
    _
  $region3: #{separable_conv_block.1} parent=0 // loop_header
    %s11 = sphi 0, %s15
    %p12 = scmp.ge.s32.totalorder %s11, 4
    %s21 = sphi 0, %s23
    %s24 = sphi 0, %s21
    %s25 = sphi 0, %s24
    %s41 = sphi 0, %s25
    %s45 = sphi 0, %s45
    %s47 = sphi 0, %s45
    %s48 = sphi 0, %s47
    %s62 = sphi 0, %s48
    %s66 = sphi 0, %s66
    %s68 = sphi 0, %s66
    %s69 = sphi 0, %s68
    %s83 = sphi 0, %s69
    %s87 = sphi 0, %s87
    %s89 = sphi 0, %s87
    %s90 = sphi 0, %s89
    %s104 = sphi 0, %s90
    %s108 = sphi 0, %s108
    %s110 = sphi 0, %s108
    %s111 = sphi 0, %s110
    %s125 = sphi 0, %s111
    %s131 = sphi 0, %s133
    %s134 = sphi 0, %s131
    %s135 = sphi 0, %s134
    %s151 = sphi 0, %s135
  $region4: #{separable_conv_block.1} parent=0 // loop_header_branch
    %14 = sbr.rel (%p12) target = $region8
  $region5: #{separable_conv_block.1} parent=0 // loop_body
    %s16 = ssub.s32 %s11, 1
    %s17 = ssub.s32 %s11, 2
    %s18 = sadd.s32 %s11, 1
    %s19 = ssub.s32 %s11, %s18
    %p20 = scmp.eq.s32.totalorder %s19, 0
    %s22 = sadd.s32 %s21, 1
    %s23 = scalar_select %p20, %s21, %s22
    %p26 = pneg %p20
    %p27 = scmp.eq.s32.totalorder %s11, 1
    %p28 = por %p26, %p27
    %p29 = scmp.ne.s32.totalorder %s21, %s24
    %p30 = scmp.eq.s32.totalorder %s11, 0
    %p31 = por %p29, %p30
    %p32 = scmp.ne.s32.totalorder %s21, %s24
    %p33 = scmp.eq.s32.totalorder %s16, 1
    %p34 = por %p32, %p33
    %p35 = scmp.ne.s32.totalorder %s24, %s25
    %p36 = scmp.eq.s32.totalorder %s16, 0
    %p37 = por %p35, %p36
    %p38 = scmp.ne.s32.totalorder %s24, %s25
    %p39 = scmp.eq.s32.totalorder %s17, 1
    %p40 = por %p38, %p39
    %p42 = scmp.ne.s32.totalorder %s25, %s41
    %p43 = scmp.eq.s32.totalorder %s17, 0
    %p44 = por %p42, %p43
    %s46 = sadd.s32 %s45, 1
    %p49 = scmp.eq.s32.totalorder %s11, 1
    %p50 = scmp.ne.s32.totalorder %s45, %s47
    %p51 = scmp.eq.s32.totalorder %s11, 0
    %p52 = por %p50, %p51
    %p53 = scmp.ne.s32.totalorder %s45, %s47
    %p54 = scmp.eq.s32.totalorder %s16, 1
    %p55 = por %p53, %p54
    %p56 = scmp.ne.s32.totalorder %s47, %s48
    %p57 = scmp.eq.s32.totalorder %s16, 0
    %p58 = por %p56, %p57
    %p59 = scmp.ne.s32.totalorder %s47, %s48
    %p60 = scmp.eq.s32.totalorder %s17, 1
    %p61 = por %p59, %p60
    %p63 = scmp.ne.s32.totalorder %s48, %s62
    %p64 = scmp.eq.s32.totalorder %s17, 0
    %p65 = por %p63, %p64
    %s67 = sadd.s32 %s66, 1
    %p70 = scmp.eq.s32.totalorder %s11, 1
    %p71 = scmp.ne.s32.totalorder %s66, %s68
    %p72 = scmp.eq.s32.totalorder %s11, 0
    %p73 = por %p71, %p72
    %p74 = scmp.ne.s32.totalorder %s66, %s68
    %p75 = scmp.eq.s32.totalorder %s16, 1
    %p76 = por %p74, %p75
    %p77 = scmp.ne.s32.totalorder %s68, %s69
    %p78 = scmp.eq.s32.totalorder %s16, 0
    %p79 = por %p77, %p78
    %p80 = scmp.ne.s32.totalorder %s68, %s69
    %p81 = scmp.eq.s32.totalorder %s17, 1
    %p82 = por %p80, %p81
    %p84 = scmp.ne.s32.totalorder %s69, %s83
    %p85 = scmp.eq.s32.totalorder %s17, 0
    %p86 = por %p84, %p85
    %s88 = sadd.s32 %s87, 1
    %p91 = scmp.eq.s32.totalorder %s11, 1
    %p92 = scmp.ne.s32.totalorder %s87, %s89
    %p93 = scmp.eq.s32.totalorder %s11, 0
    %p94 = por %p92, %p93
    %p95 = scmp.ne.s32.totalorder %s87, %s89
    %p96 = scmp.eq.s32.totalorder %s16, 1
    %p97 = por %p95, %p96
    %p98 = scmp.ne.s32.totalorder %s89, %s90
    %p99 = scmp.eq.s32.totalorder %s16, 0
    %p100 = por %p98, %p99
    %p101 = scmp.ne.s32.totalorder %s89, %s90
    %p102 = scmp.eq.s32.totalorder %s17, 1
    %p103 = por %p101, %p102
    %p105 = scmp.ne.s32.totalorder %s90, %s104
    %p106 = scmp.eq.s32.totalorder %s17, 0
    %p107 = por %p105, %p106
    %s109 = sadd.s32 %s108, 1
    %p112 = scmp.eq.s32.totalorder %s11, 1
    %p113 = scmp.ne.s32.totalorder %s108, %s110
    %p114 = scmp.eq.s32.totalorder %s11, 0
    %p115 = por %p113, %p114
    %p116 = scmp.ne.s32.totalorder %s108, %s110
    %p117 = scmp.eq.s32.totalorder %s16, 1
    %p118 = por %p116, %p117
    %p119 = scmp.ne.s32.totalorder %s110, %s111
    %p120 = scmp.eq.s32.totalorder %s16, 0
    %p121 = por %p119, %p120
    %p122 = scmp.ne.s32.totalorder %s110, %s111
    %p123 = scmp.eq.s32.totalorder %s17, 1
    %p124 = por %p122, %p123
    %p126 = scmp.ne.s32.totalorder %s111, %s125
    %p127 = scmp.eq.s32.totalorder %s17, 0
    %p128 = por %p126, %p127
    %s129 = ssub.s32 %s11, %s18
    %p130 = scmp.eq.s32.totalorder %s129, 0
    %s132 = sadd.s32 %s131, 1
    %s133 = scalar_select %p130, %s131, %s132
    %p136 = pneg %p130
    %p137 = scmp.eq.s32.totalorder %s11, 1
    %p138 = por %p136, %p137
    %p139 = scmp.ne.s32.totalorder %s131, %s134
    %p140 = scmp.eq.s32.totalorder %s11, 0
    %p141 = por %p139, %p140
    %p142 = scmp.ne.s32.totalorder %s131, %s134
    %p143 = scmp.eq.s32.totalorder %s16, 1
    %p144 = por %p142, %p143
    %p145 = scmp.ne.s32.totalorder %s134, %s135
    %p146 = scmp.eq.s32.totalorder %s16, 0
    %p147 = por %p145, %p146
    %p148 = scmp.ne.s32.totalorder %s134, %s135
    %p149 = scmp.eq.s32.totalorder %s17, 1
    %p150 = por %p148, %p149
    %p152 = scmp.ne.s32.totalorder %s135, %s151
    %p153 = scmp.eq.s32.totalorder %s17, 0
    %p154 = por %p152, %p153
    %p155 = scmp.le.s32.totalorder 1, %s11
    %p156 = scmp.lt.s32.totalorder %s11, 3
    %p157 = pnand %p155, %p156
    %p158 = pneg %p157
    // Predicated region
    $region9: #{separable_conv_block.1} parent=5 // pred_check
      _
    $region10: #{separable_conv_block.1} parent=5 // pred_check_branch
      %160 = sbr.rel (%p157) target = $region12
    $region11: #{separable_conv_block.1} parent=5 // pred_region
      %s161 = ssub.s32 %s11, 1
      // Predicated region
      $region13: #{separable_conv_block.1} parent=11 // pred_check
        %p162 = pneg %p58
      $region14: #{separable_conv_block.1} parent=11 // pred_check_branch
        %164 = sbr.rel (%p162) target = $region16
      $region15: #{separable_conv_block.1} parent=11 // pred_region
        _
      $region16: #{separable_conv_block.1} parent=11 // pred_fallthru
        _
      // Predicated region
      $region17: #{separable_conv_block.1} parent=11 // pred_check
        %p165 = pneg %p79
      $region18: #{separable_conv_block.1} parent=11 // pred_check_branch
        %167 = sbr.rel (%p165) target = $region20
      $region19: #{separable_conv_block.1} parent=11 // pred_region
        _
      $region20: #{separable_conv_block.1} parent=11 // pred_fallthru
        _
      // Predicated region
      $region21: #{separable_conv_block.1} parent=11 // pred_check
        %p168 = pneg %p100
      $region22: #{separable_conv_block.1} parent=11 // pred_check_branch
        %170 = sbr.rel (%p168) target = $region24
      $region23: #{separable_conv_block.1} parent=11 // pred_region
        _
      $region24: #{separable_conv_block.1} parent=11 // pred_fallthru
        _
      // Predicated region
      $region25: #{separable_conv_block.1} parent=11 // pred_check
        %p171 = pneg %p121
      $region26: #{separable_conv_block.1} parent=11 // pred_check_branch
        %173 = sbr.rel (%p171) target = $region28
      $region27: #{separable_conv_block.1} parent=11 // pred_region
        _
      $region28: #{separable_conv_block.1} parent=11 // pred_fallthru
        _
    $region12: #{separable_conv_block.1} parent=5 // pred_fallthru
      _
    %p174 = scmp.lt.s32.totalorder %s11, 2
    // Predicated region
    $region29: #{separable_conv_block.1} parent=5 // pred_check
      %p175 = pneg %p174
    $region30: #{separable_conv_block.1} parent=5 // pred_check_branch
      %177 = sbr.rel (%p175) target = $region32
    $region31: #{separable_conv_block.1} parent=5 // pred_region
      // Predicated region
      $region33: #{separable_conv_block.1} parent=31 // pred_check
        %p178 = pneg %p31
      $region34: #{separable_conv_block.1} parent=31 // pred_check_branch
        %180 = sbr.rel (%p178) target = $region36
      $region35: #{separable_conv_block.1} parent=31 // pred_region
        %p181 = scmp.lt.s32.totalorder %s11, 1
        %s182 = scalar_select %p181, %s11, 1
        %s183 = smul.addr %s182, 18
        %s184 = smul.addr %s183, 8
        %s185 = scalar_lea.vmem %s0, %s184
      $region36: #{separable_conv_block.1} parent=31 // pred_fallthru
        _
    $region32: #{separable_conv_block.1} parent=5 // pred_fallthru
      _
    %p186 = scmp.le.s32.totalorder 1, %s11
    %p187 = scmp.lt.s32.totalorder %s11, 3
    %p188 = pnand %p186, %p187
    %p189 = pneg %p188
    // Predicated region
    $region37: #{separable_conv_block.1} parent=5 // pred_check
      _
    $region38: #{separable_conv_block.1} parent=5 // pred_check_branch
      %191 = sbr.rel (%p188) target = $region40
    $region39: #{separable_conv_block.1} parent=5 // pred_region
      %s192 = ssub.s32 %s11, 1
      %p193 = scmp.lt.s32.totalorder %s16, 1
      %s194 = scalar_select %p193, %s16, 1
      %s195 = smul.addr %s194, 18
      %s196 = smul.addr %s195, 8
      %s197 = scalar_lea.vmem %s0, %s196
      %p198 = pneg %p37
      %p199 = pneg %p34
      %p200 = pneg %p58
      %p201 = pneg %p55
      %p202 = pneg %p79
      %p203 = pneg %p76
      %p204 = pneg %p100
      %p205 = pneg %p97
      %p206 = pneg %p121
      %p207 = pneg %p118
      %p208 = pneg %p147
      %p209 = pneg %p144
      %p210 = scmp.lt.s32.totalorder %s16, 1
      %s211 = scalar_select %p210, %s16, 1
      %s212 = smul.addr %s211, 18
      %s213 = smul.addr %s212, 8
      %s214 = scalar_lea.vmem %s5, %s213
      %p215 = scmp.lt.s32.totalorder %s16, 1
      %s216 = scalar_select %p215, %s16, 1
      %s217 = smul.addr %s216, 18
      %s218 = smul.addr %s217, 8
      %s219 = scalar_lea.vmem %s0, %s218
      %p220 = scmp.lt.s32.totalorder %s16, 1
      %s221 = scalar_select %p220, %s16, 1
      %s222 = smul.addr %s221, 18
      %s223 = smul.addr %s222, 8
      %s224 = scalar_lea.vmem %s5, %s223
      %vm226 = vcmask 269312
      %227 = vst.msk [vmem:[#allocation2] sm:$0xff] %vm226, 0.0
      %228 = vst.msk [vmem:[#allocation2 + $0x38] sm:$0xff] %vm226, 0.0
      %229 = vst.msk [vmem:[#allocation2 + $0x70] sm:$0xff] %vm226, 0.0
      %vm230 = vcmask 589064
      %231 = vst.msk [vmem:[#allocation2 + $0x30] sm:$0xff] %vm230, 0.0
      %232 = vst.msk [vmem:[#allocation2 + $0x68] sm:$0xff] %vm230, 0.0
      %233 = vst.msk [vmem:[#allocation2 + $0xa0] sm:$0xff] %vm230, 0.0
      %v234 = vld [vmem:[%s219] sm:$0xff]
      %v235 = vld [vmem:[%s219 + $0x8] sm:$0xff]
      %v236 = vld [vmem:[%s219 + $0x10] sm:$0xff]
      %v237 = vld [vmem:[%s219 + $0x18] sm:$0xff]
      %v238 = vld [vmem:[%s219 + $0x20] sm:$0xff]
      %v239 = vld [vmem:[%s219 + $0x28] sm:$0xff]
      %v240 = vld [vmem:[%s219 + $0x30] sm:$0xff]
      %v241 = vld [vmem:[%s219 + $0x38] sm:$0xff]
      %v242 = vld [vmem:[%s219 + $0x40] sm:$0xff]
      %v243 = vld [vmem:[%s219 + $0x48] sm:$0xff]
      %v244 = vld [vmem:[%s219 + $0x50] sm:$0xff]
      %v245 = vld [vmem:[%s219 + $0x58] sm:$0xff]
      %v246 = vld [vmem:[%s219 + $0x60] sm:$0xff]
      %v247 = vld [vmem:[%s219 + $0x68] sm:$0xff]
      %v248 = vld [vmem:[%s219 + $0x70] sm:$0xff]
      %v249 = vld [vmem:[%s219 + $0x78] sm:$0xff]
      %v250 = vld [vmem:[%s219 + $0x80] sm:$0xff]
      %v251 = vld [vmem:[%s219 + $0x88] sm:$0xff]
      %270 = vrot.lane.b32.xlu0 %v234, 33
      %v271 = vpop.permute.xlu0 %270
      %272 = vrot.lane.b32.xlu0 %v235, 33
      %v273 = vpop.permute.xlu0 %272
      %274 = vrot.lane.b32.xlu0 %v236, 33
      %v275 = vpop.permute.xlu0 %274
      %276 = vrot.lane.b32.xlu0 %v237, 33
      %v277 = vpop.permute.xlu0 %276
      %278 = vrot.lane.b32.xlu0 %v238, 33
      %v279 = vpop.permute.xlu0 %278
      %280 = vrot.lane.b32.xlu0 %v239, 33
      %v281 = vpop.permute.xlu0 %280
      %282 = vrot.lane.b32.xlu0 %v240, 33
      %v283 = vpop.permute.xlu0 %282
      %284 = vrot.lane.b32.xlu0 %v241, 33
      %v285 = vpop.permute.xlu0 %284
      %286 = vrot.lane.b32.xlu0 %v242, 33
      %v287 = vpop.permute.xlu0 %286
      %288 = vrot.lane.b32.xlu0 %v243, 33
      %v289 = vpop.permute.xlu0 %288
      %290 = vrot.lane.b32.xlu0 %v244, 33
      %v291 = vpop.permute.xlu0 %290
      %292 = vrot.lane.b32.xlu0 %v245, 33
      %v293 = vpop.permute.xlu0 %292
      %294 = vrot.lane.b32.xlu0 %v246, 33
      %v295 = vpop.permute.xlu0 %294
      %296 = vrot.lane.b32.xlu0 %v247, 33
      %v297 = vpop.permute.xlu0 %296
      %298 = vrot.lane.b32.xlu0 %v248, 33
      %v299 = vpop.permute.xlu0 %298
      %300 = vrot.lane.b32.xlu0 %v249, 33
      %v301 = vpop.permute.xlu0 %300
      %302 = vrot.lane.b32.xlu0 %v250, 33
      %v303 = vpop.permute.xlu0 %302
      %304 = vrot.lane.b32.xlu0 %v251, 33
      %v305 = vpop.permute.xlu0 %304
      %v306 = vsel %vm226, %v271, %v273
      %v307 = vsel %vm226, %v273, %v275
      %v308 = vsel %vm226, %v275, %v277
      %v309 = vsel %vm226, %v277, %v279
      %v310 = vsel %vm226, %v279, %v281
      %v311 = vsel %vm226, %v283, %v285
      %v312 = vsel %vm226, %v285, %v287
      %v313 = vsel %vm226, %v287, %v289
      %v314 = vsel %vm226, %v289, %v291
      %v315 = vsel %vm226, %v291, %v293
      %v316 = vsel %vm226, %v295, %v297
      %v317 = vsel %vm226, %v297, %v299
      %v318 = vsel %vm226, %v299, %v301
      %v319 = vsel %vm226, %v301, %v303
      %v320 = vsel %vm226, %v303, %v305
      %vm342 = vcmask 1047816
      %343 = vst.msk [vmem:[#allocation2] sm:$0xff] %vm342, %v271
      %344 = vst [vmem:[#allocation2 + $0x8] sm:$0xff] %v306
      %345 = vst [vmem:[#allocation2 + $0x10] sm:$0xff] %v307
      %346 = vst [vmem:[#allocation2 + $0x18] sm:$0xff] %v308
      %347 = vst [vmem:[#allocation2 + $0x20] sm:$0xff] %v309
      %348 = vst [vmem:[#allocation2 + $0x28] sm:$0xff] %v310
      %349 = vst.msk [vmem:[#allocation2 + $0x30] sm:$0xff] %vm226, %v281
      %350 = vst.msk [vmem:[#allocation2 + $0x38] sm:$0xff] %vm342, %v283
      %351 = vst [vmem:[#allocation2 + $0x40] sm:$0xff] %v311
      %352 = vst [vmem:[#allocation2 + $0x48] sm:$0xff] %v312
      %353 = vst [vmem:[#allocation2 + $0x50] sm:$0xff] %v313
      %354 = vst [vmem:[#allocation2 + $0x58] sm:$0xff] %v314
      %355 = vst [vmem:[#allocation2 + $0x60] sm:$0xff] %v315
      %356 = vst.msk [vmem:[#allocation2 + $0x68] sm:$0xff] %vm226, %v293
      %357 = vst.msk [vmem:[#allocation2 + $0x70] sm:$0xff] %vm342, %v295
      %358 = vst [vmem:[#allocation2 + $0x78] sm:$0xff] %v316
      %359 = vst [vmem:[#allocation2 + $0x80] sm:$0xff] %v317
      %360 = vst [vmem:[#allocation2 + $0x88] sm:$0xff] %v318
      %361 = vst [vmem:[#allocation2 + $0x90] sm:$0xff] %v319
      %362 = vst [vmem:[#allocation2 + $0x98] sm:$0xff] %v320
      %363 = vst.msk [vmem:[#allocation2 + $0xa0] sm:$0xff] %vm226, %v305
      %v364 = vld [vmem:[%s1] sm:$0xff]
      %v365 = vld [vmem:[%s1 + $0x8] sm:$0xff]
      %v366 = vld [vmem:[%s1 + $0x10] sm:$0xff]
      %v367 = vld [vmem:[%s4] sm:$0xff]
      %v368 = vld [vmem:[%s4 + $0x8] sm:$0xf]
      %v369 = vld [vmem:[#allocation2] sm:$0xff]
      %v370 = vld [vmem:[#allocation2 + $0x8] sm:$0xff]
      %v371 = vld [vmem:[#allocation2 + $0x10] sm:$0xff]
      %v372 = vld [vmem:[#allocation2 + $0x18] sm:$0xff]
      %v373 = vld [vmem:[#allocation2 + $0x20] sm:$0xff]
      %v374 = vld [vmem:[#allocation2 + $0x28] sm:$0xff]
      %v375 = vld [vmem:[#allocation2 + $0x38] sm:$0xff]
      %v376 = vld [vmem:[#allocation2 + $0x40] sm:$0xff]
      %v377 = vld [vmem:[#allocation2 + $0x48] sm:$0xff]
      %v378 = vld [vmem:[#allocation2 + $0x50] sm:$0xff]
      %v379 = vld [vmem:[#allocation2 + $0x58] sm:$0xff]
      %v380 = vld [vmem:[#allocation2 + $0x60] sm:$0xff]
      %v381 = vld [vmem:[#allocation2 + $0x70] sm:$0xff]
      %v382 = vld [vmem:[#allocation2 + $0x78] sm:$0xff]
      %v383 = vld [vmem:[#allocation2 + $0x80] sm:$0xff]
      %v384 = vld [vmem:[#allocation2 + $0x88] sm:$0xff]
      %v385 = vld [vmem:[#allocation2 + $0x90] sm:$0xff]
      %v386 = vld [vmem:[#allocation2 + $0x98] sm:$0xff]
      %v389 = vlaneseq
      %v390 = vshrl.u32 %v389, 7
      %v391 = vsub.s32 0, %v390
      %v392 = vrot.slane %v367, %v391
      %v393 = vlaneseq
      %v394 = vshrl.u32 %v393, 7
      %v395 = vsub.s32 2, %v394
      %v396 = vrot.slane %v367, %v395
      %v397 = vlaneseq
      %v398 = vshrl.u32 %v397, 7
      %v399 = vsub.s32 4, %v398
      %v400 = vrot.slane %v367, %v399
      %v401 = vlaneseq
      %v402 = vshrl.u32 %v401, 7
      %v403 = vsub.s32 6, %v402
      %v404 = vrot.slane %v367, %v403
      %v405 = vlaneseq
      %v406 = vshrl.u32 %v405, 7
      %v407 = vsub.s32 0, %v406
      %v408 = vrot.slane %v368, %v407
      %v409 = vlaneseq
      %v410 = vshrl.u32 %v409, 7
      %v411 = vsub.s32 2, %v410
      %v412 = vrot.slane %v368, %v411
      %v419 = vlaneseq
      %v420 = vshrl.u32 %v419, 7
      %v421 = vsub.s32 0, %v420
      %v422 = vrot.slane %v392, %v421
      %v423 = vlaneseq
      %v424 = vshrl.u32 %v423, 7
      %v425 = vsub.s32 0, %v424
      %v426 = vrot.slane %v396, %v425
      %v427 = vlaneseq
      %v428 = vshrl.u32 %v427, 7
      %v429 = vsub.s32 0, %v428
      %v430 = vrot.slane %v400, %v429
      %v431 = vlaneseq
      %v432 = vshrl.u32 %v431, 7
      %v433 = vsub.s32 0, %v432
      %v434 = vrot.slane %v404, %v433
      %v435 = vlaneseq
      %v436 = vshrl.u32 %v435, 7
      %v437 = vsub.s32 0, %v436
      %v438 = vrot.slane %v408, %v437
      %v439 = vlaneseq
      %v440 = vshrl.u32 %v439, 7
      %v441 = vsub.s32 0, %v440
      %v442 = vrot.slane %v412, %v441
      %v443 = vmul.f32 %v369, %v422
      %v444 = vmul.f32 %v370, %v426
      %v445 = vmul.f32 %v371, %v430
      %v446 = vmul.f32 %v372, %v434
      %v447 = vmul.f32 %v373, %v438
      %v448 = vmul.f32 %v374, %v442
      %v449 = vmul.f32 %v375, %v422
      %v450 = vmul.f32 %v376, %v426
      %v451 = vmul.f32 %v377, %v430
      %v452 = vmul.f32 %v378, %v434
      %v453 = vmul.f32 %v379, %v438
      %v454 = vmul.f32 %v380, %v442
      %v455 = vmul.f32 %v381, %v422
      %v456 = vmul.f32 %v382, %v426
      %v457 = vmul.f32 %v383, %v430
      %v458 = vmul.f32 %v384, %v434
      %v459 = vmul.f32 %v385, %v438
      %v460 = vmul.f32 %v386, %v442
      %462 = vset.pattern.permute.xlu0 0
      %463 = vperm.xlu0 %462, %v364
      %v464 = vpop.permute.xlu0 %463
      %467 = vset.pattern.permute.xlu0 0
      %468 = vperm.xlu0 %467, %v365
      %v469 = vpop.permute.xlu0 %468
      %472 = vset.pattern.permute.xlu0 0
      %473 = vperm.xlu0 %472, %v366
      %v474 = vpop.permute.xlu0 %473
      %v476 = vmul.f32 %v443, %v464
      %v477 = vmul.f32 %v444, %v464
      %v478 = vmul.f32 %v445, %v464
      %v479 = vmul.f32 %v446, %v464
      %v480 = vmul.f32 %v447, %v464
      %v481 = vmul.f32 %v448, %v464
      %v482 = vmul.f32 %v449, %v469
      %v483 = vmul.f32 %v450, %v469
      %v484 = vmul.f32 %v451, %v469
      %v485 = vmul.f32 %v452, %v469
      %v486 = vmul.f32 %v453, %v469
      %v487 = vmul.f32 %v454, %v469
      %v488 = vmul.f32 %v455, %v474
      %v489 = vmul.f32 %v456, %v474
      %v490 = vmul.f32 %v457, %v474
      %v491 = vmul.f32 %v458, %v474
      %v492 = vmul.f32 %v459, %v474
      %v493 = vmul.f32 %v460, %v474
      %v494 = vadd.f32 %v476, 0.0
      %v495 = vadd.f32 %v477, 0.0
      %v496 = vadd.f32 %v478, 0.0
      %v497 = vadd.f32 %v479, 0.0
      %v498 = vadd.f32 %v480, 0.0
      %v499 = vadd.f32 %v481, 0.0
      %v500 = vadd.f32 %v482, 0.0
      %v501 = vadd.f32 %v483, 0.0
      %v502 = vadd.f32 %v484, 0.0
      %v503 = vadd.f32 %v485, 0.0
      %v504 = vadd.f32 %v486, 0.0
      %v505 = vadd.f32 %v487, 0.0
      %v506 = vadd.f32 %v488, 0.0
      %v507 = vadd.f32 %v489, 0.0
      %v508 = vadd.f32 %v490, 0.0
      %v509 = vadd.f32 %v491, 0.0
      %v510 = vadd.f32 %v492, 0.0
      %v511 = vadd.f32 %v493, 0.0
      %v512 = vld [vmem:[#allocation2] sm:$0xff]
      %v513 = vld [vmem:[#allocation2 + $0x8] sm:$0xff]
      %v514 = vld [vmem:[#allocation2 + $0x10] sm:$0xff]
      %v515 = vld [vmem:[#allocation2 + $0x18] sm:$0xff]
      %v516 = vld [vmem:[#allocation2 + $0x20] sm:$0xff]
      %v517 = vld [vmem:[#allocation2 + $0x28] sm:$0xff]
      %v518 = vld [vmem:[#allocation2 + $0x30] sm:$0xff]
      %v519 = vld [vmem:[#allocation2 + $0x38] sm:$0xff]
      %v520 = vld [vmem:[#allocation2 + $0x40] sm:$0xff]
      %v521 = vld [vmem:[#allocation2 + $0x48] sm:$0xff]
      %v522 = vld [vmem:[#allocation2 + $0x50] sm:$0xff]
      %v523 = vld [vmem:[#allocation2 + $0x58] sm:$0xff]
      %v524 = vld [vmem:[#allocation2 + $0x60] sm:$0xff]
      %v525 = vld [vmem:[#allocation2 + $0x68] sm:$0xff]
      %v526 = vld [vmem:[#allocation2 + $0x70] sm:$0xff]
      %v527 = vld [vmem:[#allocation2 + $0x78] sm:$0xff]
      %v528 = vld [vmem:[#allocation2 + $0x80] sm:$0xff]
      %v529 = vld [vmem:[#allocation2 + $0x88] sm:$0xff]
      %v530 = vld [vmem:[#allocation2 + $0x90] sm:$0xff]
      %v531 = vld [vmem:[#allocation2 + $0x98] sm:$0xff]
      %v532 = vld [vmem:[#allocation2 + $0xa0] sm:$0xff]
      %533 = vset.pattern.permute.xlu0 1
      %534 = vperm.xlu0 %533, %v364
      %v535 = vpop.permute.xlu0 %534
      %537 = vset.pattern.permute.xlu0 1
      %538 = vperm.xlu0 %537, %v365
      %v539 = vpop.permute.xlu0 %538
      %541 = vset.pattern.permute.xlu0 1
      %542 = vperm.xlu0 %541, %v366
      %v543 = vpop.permute.xlu0 %542
      %v545 = vmul.f32 %v512, %v535
      %v546 = vmul.f32 %v513, %v535
      %v547 = vmul.f32 %v514, %v535
      %v548 = vmul.f32 %v515, %v535
      %v549 = vmul.f32 %v516, %v535
      %v550 = vmul.f32 %v517, %v535
      %v551 = vmul.f32 %v518, %v535
      %v552 = vmul.f32 %v519, %v539
      %v553 = vmul.f32 %v520, %v539
      %v554 = vmul.f32 %v521, %v539
      %v555 = vmul.f32 %v522, %v539
      %v556 = vmul.f32 %v523, %v539
      %v557 = vmul.f32 %v524, %v539
      %v558 = vmul.f32 %v525, %v539
      %v559 = vmul.f32 %v526, %v543
      %v560 = vmul.f32 %v527, %v543
      %v561 = vmul.f32 %v528, %v543
      %v562 = vmul.f32 %v529, %v543
      %v563 = vmul.f32 %v530, %v543
      %v564 = vmul.f32 %v531, %v543
      %v565 = vmul.f32 %v532, %v543
      %587 = vrot.lane.b32.xlu0 %v545, 127
      %v588 = vpop.permute.xlu0 %587
      %589 = vrot.lane.b32.xlu0 %v546, 127
      %v590 = vpop.permute.xlu0 %589
      %591 = vrot.lane.b32.xlu0 %v547, 127
      %v592 = vpop.permute.xlu0 %591
      %593 = vrot.lane.b32.xlu0 %v548, 127
      %v594 = vpop.permute.xlu0 %593
      %595 = vrot.lane.b32.xlu0 %v549, 127
      %v596 = vpop.permute.xlu0 %595
      %597 = vrot.lane.b32.xlu0 %v550, 127
      %v598 = vpop.permute.xlu0 %597
      %599 = vrot.lane.b32.xlu0 %v551, 127
      %v600 = vpop.permute.xlu0 %599
      %601 = vrot.lane.b32.xlu0 %v552, 127
      %v602 = vpop.permute.xlu0 %601
      %603 = vrot.lane.b32.xlu0 %v553, 127
      %v604 = vpop.permute.xlu0 %603
      %605 = vrot.lane.b32.xlu0 %v554, 127
      %v606 = vpop.permute.xlu0 %605
      %607 = vrot.lane.b32.xlu0 %v555, 127
      %v608 = vpop.permute.xlu0 %607
      %609 = vrot.lane.b32.xlu0 %v556, 127
      %v610 = vpop.permute.xlu0 %609
      %611 = vrot.lane.b32.xlu0 %v557, 127
      %v612 = vpop.permute.xlu0 %611
      %613 = vrot.lane.b32.xlu0 %v558, 127
      %v614 = vpop.permute.xlu0 %613
      %615 = vrot.lane.b32.xlu0 %v559, 127
      %v616 = vpop.permute.xlu0 %615
      %617 = vrot.lane.b32.xlu0 %v560, 127
      %v618 = vpop.permute.xlu0 %617
      %619 = vrot.lane.b32.xlu0 %v561, 127
      %v620 = vpop.permute.xlu0 %619
      %621 = vrot.lane.b32.xlu0 %v562, 127
      %v622 = vpop.permute.xlu0 %621
      %623 = vrot.lane.b32.xlu0 %v563, 127
      %v624 = vpop.permute.xlu0 %623
      %625 = vrot.lane.b32.xlu0 %v564, 127
      %v626 = vpop.permute.xlu0 %625
      %627 = vrot.lane.b32.xlu0 %v565, 127
      %v628 = vpop.permute.xlu0 %627
      %vm629 = vcmask 1039360
      %v630 = vsel %vm629, %v588, %v590
      %v631 = vsel %vm629, %v590, %v592
      %v632 = vsel %vm629, %v592, %v594
      %v633 = vsel %vm629, %v594, %v596
      %v634 = vsel %vm629, %v596, %v598
      %v635 = vsel %vm629, %v598, %v600
      %v636 = vsel %vm629, %v602, %v604
      %v637 = vsel %vm629, %v604, %v606
      %v638 = vsel %vm629, %v606, %v608
      %v639 = vsel %vm629, %v608, %v610
      %v640 = vsel %vm629, %v610, %v612
      %v641 = vsel %vm629, %v612, %v614
      %v642 = vsel %vm629, %v616, %v618
      %v643 = vsel %vm629, %v618, %v620
      %v644 = vsel %vm629, %v620, %v622
      %v645 = vsel %vm629, %v622, %v624
      %v646 = vsel %vm629, %v624, %v626
      %v647 = vsel %vm629, %v626, %v628
      %v666 = vadd.f32 %v494, %v630
      %v667 = vadd.f32 %v495, %v631
      %v668 = vadd.f32 %v496, %v632
      %v669 = vadd.f32 %v497, %v633
      %v670 = vadd.f32 %v498, %v634
      %v671 = vadd.f32 %v499, %v635
      %v672 = vadd.f32 %v500, %v636
      %v673 = vadd.f32 %v501, %v637
      %v674 = vadd.f32 %v502, %v638
      %v675 = vadd.f32 %v503, %v639
      %v676 = vadd.f32 %v504, %v640
      %v677 = vadd.f32 %v505, %v641
      %v678 = vadd.f32 %v506, %v642
      %v679 = vadd.f32 %v507, %v643
      %v680 = vadd.f32 %v508, %v644
      %v681 = vadd.f32 %v509, %v645
      %v682 = vadd.f32 %v510, %v646
      %v683 = vadd.f32 %v511, %v647
      %v684 = vlaneseq
      %v685 = vshrl.u32 %v684, 7
      %v686 = vsub.s32 1, %v685
      %v687 = vrot.slane %v367, %v686
      %v688 = vlaneseq
      %v689 = vshrl.u32 %v688, 7
      %v690 = vsub.s32 3, %v689
      %v691 = vrot.slane %v367, %v690
      %v692 = vlaneseq
      %v693 = vshrl.u32 %v692, 7
      %v694 = vsub.s32 5, %v693
      %v695 = vrot.slane %v367, %v694
      %v696 = vlaneseq
      %v697 = vshrl.u32 %v696, 7
      %v698 = vsub.s32 7, %v697
      %v699 = vrot.slane %v367, %v698
      %v700 = vlaneseq
      %v701 = vshrl.u32 %v700, 7
      %v702 = vsub.s32 1, %v701
      %v703 = vrot.slane %v368, %v702
      %v704 = vlaneseq
      %v705 = vshrl.u32 %v704, 7
      %v706 = vsub.s32 3, %v705
      %v707 = vrot.slane %v368, %v706
      %v714 = vlaneseq
      %v715 = vshrl.u32 %v714, 7
      %v716 = vsub.s32 1, %v715
      %v717 = vrot.slane %v687, %v716
      %v718 = vlaneseq
      %v719 = vshrl.u32 %v718, 7
      %v720 = vsub.s32 1, %v719
      %v721 = vrot.slane %v691, %v720
      %v722 = vlaneseq
      %v723 = vshrl.u32 %v722, 7
      %v724 = vsub.s32 1, %v723
      %v725 = vrot.slane %v695, %v724
      %v726 = vlaneseq
      %v727 = vshrl.u32 %v726, 7
      %v728 = vsub.s32 1, %v727
      %v729 = vrot.slane %v699, %v728
      %v730 = vlaneseq
      %v731 = vshrl.u32 %v730, 7
      %v732 = vsub.s32 1, %v731
      %v733 = vrot.slane %v703, %v732
      %v734 = vlaneseq
      %v735 = vshrl.u32 %v734, 7
      %v736 = vsub.s32 1, %v735
      %v737 = vrot.slane %v707, %v736
      %744 = vrot.lane.b32.xlu0 %v717, 2
      %v745 = vpop.permute.xlu0 %744
      %746 = vrot.lane.b32.xlu0 %v721, 2
      %v747 = vpop.permute.xlu0 %746
      %748 = vrot.lane.b32.xlu0 %v725, 2
      %v749 = vpop.permute.xlu0 %748
      %750 = vrot.lane.b32.xlu0 %v729, 2
      %v751 = vpop.permute.xlu0 %750
      %752 = vrot.lane.b32.xlu0 %v733, 2
      %v753 = vpop.permute.xlu0 %752
      %754 = vrot.lane.b32.xlu0 %v737, 2
      %v755 = vpop.permute.xlu0 %754
      %vm756 = vcmask 15360
      %v757 = vsel %vm756, %v745, %v747
      %v758 = vsel %vm756, %v747, %v749
      %v759 = vsel %vm756, %v749, %v751
      %v760 = vsel %vm756, %v751, %v753
      %v761 = vsel %vm756, %v753, %v755
      %v769 = vmul.f32 %v512, %v745
      %v770 = vmul.f32 %v513, %v757
      %v771 = vmul.f32 %v514, %v758
      %v772 = vmul.f32 %v515, %v759
      %v773 = vmul.f32 %v516, %v760
      %v774 = vmul.f32 %v517, %v761
      %v775 = vmul.f32 %v518, %v755
      %v776 = vmul.f32 %v519, %v745
      %v777 = vmul.f32 %v520, %v757
      %v778 = vmul.f32 %v521, %v758
      %v779 = vmul.f32 %v522, %v759
      %v780 = vmul.f32 %v523, %v760
      %v781 = vmul.f32 %v524, %v761
      %v782 = vmul.f32 %v525, %v755
      %v783 = vmul.f32 %v526, %v745
      %v784 = vmul.f32 %v527, %v757
      %v785 = vmul.f32 %v528, %v758
      %v786 = vmul.f32 %v529, %v759
      %v787 = vmul.f32 %v530, %v760
      %v788 = vmul.f32 %v531, %v761
      %v789 = vmul.f32 %v532, %v755
      %790 = vset.pattern.permute.xlu0 2
      %791 = vperm.xlu0 %790, %v364
      %v792 = vpop.permute.xlu0 %791
      %794 = vset.pattern.permute.xlu0 2
      %795 = vperm.xlu0 %794, %v365
      %v796 = vpop.permute.xlu0 %795
      %798 = vset.pattern.permute.xlu0 2
      %799 = vperm.xlu0 %798, %v366
      %v800 = vpop.permute.xlu0 %799
      %v802 = vmul.f32 %v769, %v792
      %v803 = vmul.f32 %v770, %v792
      %v804 = vmul.f32 %v771, %v792
      %v805 = vmul.f32 %v772, %v792
      %v806 = vmul.f32 %v773, %v792
      %v807 = vmul.f32 %v774, %v792
      %v808 = vmul.f32 %v775, %v792
      %v809 = vmul.f32 %v776, %v796
      %v810 = vmul.f32 %v777, %v796
      %v811 = vmul.f32 %v778, %v796
      %v812 = vmul.f32 %v779, %v796
      %v813 = vmul.f32 %v780, %v796
      %v814 = vmul.f32 %v781, %v796
      %v815 = vmul.f32 %v782, %v796
      %v816 = vmul.f32 %v783, %v800
      %v817 = vmul.f32 %v784, %v800
      %v818 = vmul.f32 %v785, %v800
      %v819 = vmul.f32 %v786, %v800
      %v820 = vmul.f32 %v787, %v800
      %v821 = vmul.f32 %v788, %v800
      %v822 = vmul.f32 %v789, %v800
      %844 = vrot.lane.b32.xlu0 %v802, 126
      %v845 = vpop.permute.xlu0 %844
      %846 = vrot.lane.b32.xlu0 %v803, 126
      %v847 = vpop.permute.xlu0 %846
      %848 = vrot.lane.b32.xlu0 %v804, 126
      %v849 = vpop.permute.xlu0 %848
      %850 = vrot.lane.b32.xlu0 %v805, 126
      %v851 = vpop.permute.xlu0 %850
      %852 = vrot.lane.b32.xlu0 %v806, 126
      %v853 = vpop.permute.xlu0 %852
      %854 = vrot.lane.b32.xlu0 %v807, 126
      %v855 = vpop.permute.xlu0 %854
      %856 = vrot.lane.b32.xlu0 %v808, 126
      %v857 = vpop.permute.xlu0 %856
      %858 = vrot.lane.b32.xlu0 %v809, 126
      %v859 = vpop.permute.xlu0 %858
      %860 = vrot.lane.b32.xlu0 %v810, 126
      %v861 = vpop.permute.xlu0 %860
      %862 = vrot.lane.b32.xlu0 %v811, 126
      %v863 = vpop.permute.xlu0 %862
      %864 = vrot.lane.b32.xlu0 %v812, 126
      %v865 = vpop.permute.xlu0 %864
      %866 = vrot.lane.b32.xlu0 %v813, 126
      %v867 = vpop.permute.xlu0 %866
      %868 = vrot.lane.b32.xlu0 %v814, 126
      %v869 = vpop.permute.xlu0 %868
      %870 = vrot.lane.b32.xlu0 %v815, 126
      %v871 = vpop.permute.xlu0 %870
      %872 = vrot.lane.b32.xlu0 %v816, 126
      %v873 = vpop.permute.xlu0 %872
      %874 = vrot.lane.b32.xlu0 %v817, 126
      %v875 = vpop.permute.xlu0 %874
      %876 = vrot.lane.b32.xlu0 %v818, 126
      %v877 = vpop.permute.xlu0 %876
      %878 = vrot.lane.b32.xlu0 %v819, 126
      %v879 = vpop.permute.xlu0 %878
      %880 = vrot.lane.b32.xlu0 %v820, 126
      %v881 = vpop.permute.xlu0 %880
      %882 = vrot.lane.b32.xlu0 %v821, 126
      %v883 = vpop.permute.xlu0 %882
      %884 = vrot.lane.b32.xlu0 %v822, 126
      %v885 = vpop.permute.xlu0 %884
      %vm886 = vcmask 1031168
      %v887 = vsel %vm886, %v845, %v847
      %v888 = vsel %vm886, %v847, %v849
      %v889 = vsel %vm886, %v849, %v851
      %v890 = vsel %vm886, %v851, %v853
      %v891 = vsel %vm886, %v853, %v855
      %v892 = vsel %vm886, %v855, %v857
      %v893 = vsel %vm886, %v859, %v861
      %v894 = vsel %vm886, %v861, %v863
      %v895 = vsel %vm886, %v863, %v865
      %v896 = vsel %vm886, %v865, %v867
      %v897 = vsel %vm886, %v867, %v869
      %v898 = vsel %vm886, %v869, %v871
      %v899 = vsel %vm886, %v873, %v875
      %v900 = vsel %vm886, %v875, %v877
      %v901 = vsel %vm886, %v877, %v879
      %v902 = vsel %vm886, %v879, %v881
      %v903 = vsel %vm886, %v881, %v883
      %v904 = vsel %vm886, %v883, %v885
      %v923 = vadd.f32 %v666, %v887
      %v924 = vadd.f32 %v667, %v888
      %v925 = vadd.f32 %v668, %v889
      %v926 = vadd.f32 %v669, %v890
      %v927 = vadd.f32 %v670, %v891
      %v928 = vadd.f32 %v671, %v892
      %v929 = vadd.f32 %v672, %v893
      %v930 = vadd.f32 %v673, %v894
      %v931 = vadd.f32 %v674, %v895
      %v932 = vadd.f32 %v675, %v896
      %v933 = vadd.f32 %v676, %v897
      %v934 = vadd.f32 %v677, %v898
      %v935 = vadd.f32 %v678, %v899
      %v936 = vadd.f32 %v679, %v900
      %v937 = vadd.f32 %v680, %v901
      %v938 = vadd.f32 %v681, %v902
      %v939 = vadd.f32 %v682, %v903
      %v940 = vadd.f32 %v683, %v904
      %947 = vrot.lane.b32.xlu0 %v422, 32
      %v948 = vpop.permute.xlu0 %947
      %949 = vrot.lane.b32.xlu0 %v426, 32
      %v950 = vpop.permute.xlu0 %949
      %951 = vrot.lane.b32.xlu0 %v430, 32
      %v952 = vpop.permute.xlu0 %951
      %953 = vrot.lane.b32.xlu0 %v434, 32
      %v954 = vpop.permute.xlu0 %953
      %955 = vrot.lane.b32.xlu0 %v438, 32
      %v956 = vpop.permute.xlu0 %955
      %957 = vrot.lane.b32.xlu0 %v442, 32
      %v958 = vpop.permute.xlu0 %957
      %vm959 = vcmask 261120
      %v960 = vsel %vm959, %v948, %v950
      %v961 = vsel %vm959, %v950, %v952
      %v962 = vsel %vm959, %v952, %v954
      %v963 = vsel %vm959, %v954, %v956
      %v964 = vsel %vm959, %v956, %v958
      %v972 = vmul.f32 %v512, %v948
      %v973 = vmul.f32 %v513, %v960
      %v974 = vmul.f32 %v514, %v961
      %v975 = vmul.f32 %v515, %v962
      %v976 = vmul.f32 %v516, %v963
      %v977 = vmul.f32 %v517, %v964
      %v978 = vmul.f32 %v518, %v958
      %v979 = vmul.f32 %v519, %v948
      %v980 = vmul.f32 %v520, %v960
      %v981 = vmul.f32 %v521, %v961
      %v982 = vmul.f32 %v522, %v962
      %v983 = vmul.f32 %v523, %v963
      %v984 = vmul.f32 %v524, %v964
      %v985 = vmul.f32 %v525, %v958
      %v986 = vmul.f32 %v526, %v948
      %v987 = vmul.f32 %v527, %v960
      %v988 = vmul.f32 %v528, %v961
      %v989 = vmul.f32 %v529, %v962
      %v990 = vmul.f32 %v530, %v963
      %v991 = vmul.f32 %v531, %v964
      %v992 = vmul.f32 %v532, %v958
      %993 = vset.pattern.permute.xlu0 3
      %994 = vperm.xlu0 %993, %v364
      %v995 = vpop.permute.xlu0 %994
      %997 = vset.pattern.permute.xlu0 3
      %998 = vperm.xlu0 %997, %v365
      %v999 = vpop.permute.xlu0 %998
      %1001 = vset.pattern.permute.xlu0 3
      %1002 = vperm.xlu0 %1001, %v366
      %v1003 = vpop.permute.xlu0 %1002
      %v1005 = vmul.f32 %v972, %v995
      %v1006 = vmul.f32 %v973, %v995
      %v1007 = vmul.f32 %v974, %v995
      %v1008 = vmul.f32 %v975, %v995
      %v1009 = vmul.f32 %v976, %v995
      %v1010 = vmul.f32 %v977, %v995
      %v1011 = vmul.f32 %v978, %v995
      %v1012 = vmul.f32 %v979, %v999
      %v1013 = vmul.f32 %v980, %v999
      %v1014 = vmul.f32 %v981, %v999
      %v1015 = vmul.f32 %v982, %v999
      %v1016 = vmul.f32 %v983, %v999
      %v1017 = vmul.f32 %v984, %v999
      %v1018 = vmul.f32 %v985, %v999
      %v1019 = vmul.f32 %v986, %v1003
      %v1020 = vmul.f32 %v987, %v1003
      %v1021 = vmul.f32 %v988, %v1003
      %v1022 = vmul.f32 %v989, %v1003
      %v1023 = vmul.f32 %v990, %v1003
      %v1024 = vmul.f32 %v991, %v1003
      %v1025 = vmul.f32 %v992, %v1003
      %1047 = vrot.lane.b32.xlu0 %v1005, 96
      %v1048 = vpop.permute.xlu0 %1047
      %1049 = vrot.lane.b32.xlu0 %v1006, 96
      %v1050 = vpop.permute.xlu0 %1049
      %1051 = vrot.lane.b32.xlu0 %v1007, 96
      %v1052 = vpop.permute.xlu0 %1051
      %1053 = vrot.lane.b32.xlu0 %v1008, 96
      %v1054 = vpop.permute.xlu0 %1053
      %1055 = vrot.lane.b32.xlu0 %v1009, 96
      %v1056 = vpop.permute.xlu0 %1055
      %1057 = vrot.lane.b32.xlu0 %v1010, 96
      %v1058 = vpop.permute.xlu0 %1057
      %1059 = vrot.lane.b32.xlu0 %v1011, 96
      %v1060 = vpop.permute.xlu0 %1059
      %1061 = vrot.lane.b32.xlu0 %v1012, 96
      %v1062 = vpop.permute.xlu0 %1061
      %1063 = vrot.lane.b32.xlu0 %v1013, 96
      %v1064 = vpop.permute.xlu0 %1063
      %1065 = vrot.lane.b32.xlu0 %v1014, 96
      %v1066 = vpop.permute.xlu0 %1065
      %1067 = vrot.lane.b32.xlu0 %v1015, 96
      %v1068 = vpop.permute.xlu0 %1067
      %1069 = vrot.lane.b32.xlu0 %v1016, 96
      %v1070 = vpop.permute.xlu0 %1069
      %1071 = vrot.lane.b32.xlu0 %v1017, 96
      %v1072 = vpop.permute.xlu0 %1071
      %1073 = vrot.lane.b32.xlu0 %v1018, 96
      %v1074 = vpop.permute.xlu0 %1073
      %1075 = vrot.lane.b32.xlu0 %v1019, 96
      %v1076 = vpop.permute.xlu0 %1075
      %1077 = vrot.lane.b32.xlu0 %v1020, 96
      %v1078 = vpop.permute.xlu0 %1077
      %1079 = vrot.lane.b32.xlu0 %v1021, 96
      %v1080 = vpop.permute.xlu0 %1079
      %1081 = vrot.lane.b32.xlu0 %v1022, 96
      %v1082 = vpop.permute.xlu0 %1081
      %1083 = vrot.lane.b32.xlu0 %v1023, 96
      %v1084 = vpop.permute.xlu0 %1083
      %1085 = vrot.lane.b32.xlu0 %v1024, 96
      %v1086 = vpop.permute.xlu0 %1085
      %1087 = vrot.lane.b32.xlu0 %v1025, 96
      %v1088 = vpop.permute.xlu0 %1087
      %vm1089 = vcmask 785408
      %v1090 = vsel %vm1089, %v1048, %v1050
      %v1091 = vsel %vm1089, %v1050, %v1052
      %v1092 = vsel %vm1089, %v1052, %v1054
      %v1093 = vsel %vm1089, %v1054, %v1056
      %v1094 = vsel %vm1089, %v1056, %v1058
      %v1095 = vsel %vm1089, %v1058, %v1060
      %v1096 = vsel %vm1089, %v1062, %v1064
      %v1097 = vsel %vm1089, %v1064, %v1066
      %v1098 = vsel %vm1089, %v1066, %v1068
      %v1099 = vsel %vm1089, %v1068, %v1070
      %v1100 = vsel %vm1089, %v1070, %v1072
      %v1101 = vsel %vm1089, %v1072, %v1074
      %v1102 = vsel %vm1089, %v1076, %v1078
      %v1103 = vsel %vm1089, %v1078, %v1080
      %v1104 = vsel %vm1089, %v1080, %v1082
      %v1105 = vsel %vm1089, %v1082, %v1084
      %v1106 = vsel %vm1089, %v1084, %v1086
      %v1107 = vsel %vm1089, %v1086, %v1088
      %v1126 = vadd.f32 %v923, %v1090
      %v1127 = vadd.f32 %v924, %v1091
      %v1128 = vadd.f32 %v925, %v1092
      %v1129 = vadd.f32 %v926, %v1093
      %v1130 = vadd.f32 %v927, %v1094
      %v1131 = vadd.f32 %v928, %v1095
      %v1132 = vadd.f32 %v929, %v1096
      %v1133 = vadd.f32 %v930, %v1097
      %v1134 = vadd.f32 %v931, %v1098
      %v1135 = vadd.f32 %v932, %v1099
      %v1136 = vadd.f32 %v933, %v1100
      %v1137 = vadd.f32 %v934, %v1101
      %v1138 = vadd.f32 %v935, %v1102
      %v1139 = vadd.f32 %v936, %v1103
      %v1140 = vadd.f32 %v937, %v1104
      %v1141 = vadd.f32 %v938, %v1105
      %v1142 = vadd.f32 %v939, %v1106
      %v1143 = vadd.f32 %v940, %v1107
      %1144 = vset.pattern.permute.xlu0 4
      %1145 = vperm.xlu0 %1144, %v364
      %v1146 = vpop.permute.xlu0 %1145
      %1148 = vset.pattern.permute.xlu0 4
      %1149 = vperm.xlu0 %1148, %v365
      %v1150 = vpop.permute.xlu0 %1149
      %1152 = vset.pattern.permute.xlu0 4
      %1153 = vperm.xlu0 %1152, %v366
      %v1154 = vpop.permute.xlu0 %1153
      %v1156 = vmul.f32 %v512, %v1146
      %v1157 = vmul.f32 %v513, %v1146
      %v1158 = vmul.f32 %v514, %v1146
      %v1159 = vmul.f32 %v515, %v1146
      %v1160 = vmul.f32 %v516, %v1146
      %v1161 = vmul.f32 %v517, %v1146
      %v1162 = vmul.f32 %v518, %v1146
      %v1163 = vmul.f32 %v519, %v1150
      %v1164 = vmul.f32 %v520, %v1150
      %v1165 = vmul.f32 %v521, %v1150
      %v1166 = vmul.f32 %v522, %v1150
      %v1167 = vmul.f32 %v523, %v1150
      %v1168 = vmul.f32 %v524, %v1150
      %v1169 = vmul.f32 %v525, %v1150
      %v1170 = vmul.f32 %v526, %v1154
      %v1171 = vmul.f32 %v527, %v1154
      %v1172 = vmul.f32 %v528, %v1154
      %v1173 = vmul.f32 %v529, %v1154
      %v1174 = vmul.f32 %v530, %v1154
      %v1175 = vmul.f32 %v531, %v1154
      %v1176 = vmul.f32 %v532, %v1154
      %1198 = vrot.lane.b32.xlu0 %v1156, 95
      %v1199 = vpop.permute.xlu0 %1198
      %1200 = vrot.lane.b32.xlu0 %v1157, 95
      %v1201 = vpop.permute.xlu0 %1200
      %1202 = vrot.lane.b32.xlu0 %v1158, 95
      %v1203 = vpop.permute.xlu0 %1202
      %1204 = vrot.lane.b32.xlu0 %v1159, 95
      %v1205 = vpop.permute.xlu0 %1204
      %1206 = vrot.lane.b32.xlu0 %v1160, 95
      %v1207 = vpop.permute.xlu0 %1206
      %1208 = vrot.lane.b32.xlu0 %v1161, 95
      %v1209 = vpop.permute.xlu0 %1208
      %1210 = vrot.lane.b32.xlu0 %v1162, 95
      %v1211 = vpop.permute.xlu0 %1210
      %1212 = vrot.lane.b32.xlu0 %v1163, 95
      %v1213 = vpop.permute.xlu0 %1212
      %1214 = vrot.lane.b32.xlu0 %v1164, 95
      %v1215 = vpop.permute.xlu0 %1214
      %1216 = vrot.lane.b32.xlu0 %v1165, 95
      %v1217 = vpop.permute.xlu0 %1216
      %1218 = vrot.lane.b32.xlu0 %v1166, 95
      %v1219 = vpop.permute.xlu0 %1218
      %1220 = vrot.lane.b32.xlu0 %v1167, 95
      %v1221 = vpop.permute.xlu0 %1220
      %1222 = vrot.lane.b32.xlu0 %v1168, 95
      %v1223 = vpop.permute.xlu0 %1222
      %1224 = vrot.lane.b32.xlu0 %v1169, 95
      %v1225 = vpop.permute.xlu0 %1224
      %1226 = vrot.lane.b32.xlu0 %v1170, 95
      %v1227 = vpop.permute.xlu0 %1226
      %1228 = vrot.lane.b32.xlu0 %v1171, 95
      %v1229 = vpop.permute.xlu0 %1228
      %1230 = vrot.lane.b32.xlu0 %v1172, 95
      %v1231 = vpop.permute.xlu0 %1230
      %1232 = vrot.lane.b32.xlu0 %v1173, 95
      %v1233 = vpop.permute.xlu0 %1232
      %1234 = vrot.lane.b32.xlu0 %v1174, 95
      %v1235 = vpop.permute.xlu0 %1234
      %1236 = vrot.lane.b32.xlu0 %v1175, 95
      %v1237 = vpop.permute.xlu0 %1236
      %1238 = vrot.lane.b32.xlu0 %v1176, 95
      %v1239 = vpop.permute.xlu0 %1238
      %vm1240 = vcmask 777216
      %v1241 = vsel %vm1240, %v1199, %v1201
      %v1242 = vsel %vm1240, %v1201, %v1203
      %v1243 = vsel %vm1240, %v1203, %v1205
      %v1244 = vsel %vm1240, %v1205, %v1207
      %v1245 = vsel %vm1240, %v1207, %v1209
      %v1246 = vsel %vm1240, %v1209, %v1211
      %v1247 = vsel %vm1240, %v1213, %v1215
      %v1248 = vsel %vm1240, %v1215, %v1217
      %v1249 = vsel %vm1240, %v1217, %v1219
      %v1250 = vsel %vm1240, %v1219, %v1221
      %v1251 = vsel %vm1240, %v1221, %v1223
      %v1252 = vsel %vm1240, %v1223, %v1225
      %v1253 = vsel %vm1240, %v1227, %v1229
      %v1254 = vsel %vm1240, %v1229, %v1231
      %v1255 = vsel %vm1240, %v1231, %v1233
      %v1256 = vsel %vm1240, %v1233, %v1235
      %v1257 = vsel %vm1240, %v1235, %v1237
      %v1258 = vsel %vm1240, %v1237, %v1239
      %v1277 = vadd.f32 %v1126, %v1241
      %v1278 = vadd.f32 %v1127, %v1242
      %v1279 = vadd.f32 %v1128, %v1243
      %v1280 = vadd.f32 %v1129, %v1244
      %v1281 = vadd.f32 %v1130, %v1245
      %v1282 = vadd.f32 %v1131, %v1246
      %v1283 = vadd.f32 %v1132, %v1247
      %v1284 = vadd.f32 %v1133, %v1248
      %v1285 = vadd.f32 %v1134, %v1249
      %v1286 = vadd.f32 %v1135, %v1250
      %v1287 = vadd.f32 %v1136, %v1251
      %v1288 = vadd.f32 %v1137, %v1252
      %v1289 = vadd.f32 %v1138, %v1253
      %v1290 = vadd.f32 %v1139, %v1254
      %v1291 = vadd.f32 %v1140, %v1255
      %v1292 = vadd.f32 %v1141, %v1256
      %v1293 = vadd.f32 %v1142, %v1257
      %v1294 = vadd.f32 %v1143, %v1258
      %1295 = vrot.lane.b32.xlu0 %v717, 34
      %v1296 = vpop.permute.xlu0 %1295
      %1297 = vrot.lane.b32.xlu0 %v721, 34
      %v1298 = vpop.permute.xlu0 %1297
      %1299 = vrot.lane.b32.xlu0 %v725, 34
      %v1300 = vpop.permute.xlu0 %1299
      %1301 = vrot.lane.b32.xlu0 %v729, 34
      %v1302 = vpop.permute.xlu0 %1301
      %1303 = vrot.lane.b32.xlu0 %v733, 34
      %v1304 = vpop.permute.xlu0 %1303
      %1305 = vrot.lane.b32.xlu0 %v737, 34
      %v1306 = vpop.permute.xlu0 %1305
      %vm1307 = vcmask 277504
      %v1308 = vsel %vm1307, %v1296, %v1298
      %v1309 = vsel %vm1307, %v1298, %v1300
      %v1310 = vsel %vm1307, %v1300, %v1302
      %v1311 = vsel %vm1307, %v1302, %v1304
      %v1312 = vsel %vm1307, %v1304, %v1306
      %v1320 = vmul.f32 %v512, %v1296
      %v1321 = vmul.f32 %v513, %v1308
      %v1322 = vmul.f32 %v514, %v1309
      %v1323 = vmul.f32 %v515, %v1310
      %v1324 = vmul.f32 %v516, %v1311
      %v1325 = vmul.f32 %v517, %v1312
      %v1326 = vmul.f32 %v518, %v1306
      %v1327 = vmul.f32 %v519, %v1296
      %v1328 = vmul.f32 %v520, %v1308
      %v1329 = vmul.f32 %v521, %v1309
      %v1330 = vmul.f32 %v522, %v1310
      %v1331 = vmul.f32 %v523, %v1311
      %v1332 = vmul.f32 %v524, %v1312
      %v1333 = vmul.f32 %v525, %v1306
      %v1334 = vmul.f32 %v526, %v1296
      %v1335 = vmul.f32 %v527, %v1308
      %v1336 = vmul.f32 %v528, %v1309
      %v1337 = vmul.f32 %v529, %v1310
      %v1338 = vmul.f32 %v530, %v1311
      %v1339 = vmul.f32 %v531, %v1312
      %v1340 = vmul.f32 %v532, %v1306
      %1341 = vset.pattern.permute.xlu0 5
      %1342 = vperm.xlu0 %1341, %v364
      %v1343 = vpop.permute.xlu0 %1342
      %1345 = vset.pattern.permute.xlu0 5
      %1346 = vperm.xlu0 %1345, %v365
      %v1347 = vpop.permute.xlu0 %1346
      %1349 = vset.pattern.permute.xlu0 5
      %1350 = vperm.xlu0 %1349, %v366
      %v1351 = vpop.permute.xlu0 %1350
      %v1353 = vmul.f32 %v1320, %v1343
      %v1354 = vmul.f32 %v1321, %v1343
      %v1355 = vmul.f32 %v1322, %v1343
      %v1356 = vmul.f32 %v1323, %v1343
      %v1357 = vmul.f32 %v1324, %v1343
      %v1358 = vmul.f32 %v1325, %v1343
      %v1359 = vmul.f32 %v1326, %v1343
      %v1360 = vmul.f32 %v1327, %v1347
      %v1361 = vmul.f32 %v1328, %v1347
      %v1362 = vmul.f32 %v1329, %v1347
      %v1363 = vmul.f32 %v1330, %v1347
      %v1364 = vmul.f32 %v1331, %v1347
      %v1365 = vmul.f32 %v1332, %v1347
      %v1366 = vmul.f32 %v1333, %v1347
      %v1367 = vmul.f32 %v1334, %v1351
      %v1368 = vmul.f32 %v1335, %v1351
      %v1369 = vmul.f32 %v1336, %v1351
      %v1370 = vmul.f32 %v1337, %v1351
      %v1371 = vmul.f32 %v1338, %v1351
      %v1372 = vmul.f32 %v1339, %v1351
      %v1373 = vmul.f32 %v1340, %v1351
      %1395 = vrot.lane.b32.xlu0 %v1353, 94
      %v1396 = vpop.permute.xlu0 %1395
      %1397 = vrot.lane.b32.xlu0 %v1354, 94
      %v1398 = vpop.permute.xlu0 %1397
      %1399 = vrot.lane.b32.xlu0 %v1355, 94
      %v1400 = vpop.permute.xlu0 %1399
      %1401 = vrot.lane.b32.xlu0 %v1356, 94
      %v1402 = vpop.permute.xlu0 %1401
      %1403 = vrot.lane.b32.xlu0 %v1357, 94
      %v1404 = vpop.permute.xlu0 %1403
      %1405 = vrot.lane.b32.xlu0 %v1358, 94
      %v1406 = vpop.permute.xlu0 %1405
      %1407 = vrot.lane.b32.xlu0 %v1359, 94
      %v1408 = vpop.permute.xlu0 %1407
      %1409 = vrot.lane.b32.xlu0 %v1360, 94
      %v1410 = vpop.permute.xlu0 %1409
      %1411 = vrot.lane.b32.xlu0 %v1361, 94
      %v1412 = vpop.permute.xlu0 %1411
      %1413 = vrot.lane.b32.xlu0 %v1362, 94
      %v1414 = vpop.permute.xlu0 %1413
      %1415 = vrot.lane.b32.xlu0 %v1363, 94
      %v1416 = vpop.permute.xlu0 %1415
      %1417 = vrot.lane.b32.xlu0 %v1364, 94
      %v1418 = vpop.permute.xlu0 %1417
      %1419 = vrot.lane.b32.xlu0 %v1365, 94
      %v1420 = vpop.permute.xlu0 %1419
      %1421 = vrot.lane.b32.xlu0 %v1366, 94
      %v1422 = vpop.permute.xlu0 %1421
      %1423 = vrot.lane.b32.xlu0 %v1367, 94
      %v1424 = vpop.permute.xlu0 %1423
      %1425 = vrot.lane.b32.xlu0 %v1368, 94
      %v1426 = vpop.permute.xlu0 %1425
      %1427 = vrot.lane.b32.xlu0 %v1369, 94
      %v1428 = vpop.permute.xlu0 %1427
      %1429 = vrot.lane.b32.xlu0 %v1370, 94
      %v1430 = vpop.permute.xlu0 %1429
      %1431 = vrot.lane.b32.xlu0 %v1371, 94
      %v1432 = vpop.permute.xlu0 %1431
      %1433 = vrot.lane.b32.xlu0 %v1372, 94
      %v1434 = vpop.permute.xlu0 %1433
      %1435 = vrot.lane.b32.xlu0 %v1373, 94
      %v1436 = vpop.permute.xlu0 %1435
      %vm1437 = vcmask 769024
      %v1438 = vsel %vm1437, %v1396, %v1398
      %v1439 = vsel %vm1437, %v1398, %v1400
      %v1440 = vsel %vm1437, %v1400, %v1402
      %v1441 = vsel %vm1437, %v1402, %v1404
      %v1442 = vsel %vm1437, %v1404, %v1406
      %v1443 = vsel %vm1437, %v1406, %v1408
      %v1444 = vsel %vm1437, %v1410, %v1412
      %v1445 = vsel %vm1437, %v1412, %v1414
      %v1446 = vsel %vm1437, %v1414, %v1416
      %v1447 = vsel %vm1437, %v1416, %v1418
      %v1448 = vsel %vm1437, %v1418, %v1420
      %v1449 = vsel %vm1437, %v1420, %v1422
      %v1450 = vsel %vm1437, %v1424, %v1426
      %v1451 = vsel %vm1437, %v1426, %v1428
      %v1452 = vsel %vm1437, %v1428, %v1430
      %v1453 = vsel %vm1437, %v1430, %v1432
      %v1454 = vsel %vm1437, %v1432, %v1434
      %v1455 = vsel %vm1437, %v1434, %v1436
      %v1474 = vadd.f32 %v1277, %v1438
      %v1475 = vadd.f32 %v1278, %v1439
      %v1476 = vadd.f32 %v1279, %v1440
      %v1477 = vadd.f32 %v1280, %v1441
      %v1478 = vadd.f32 %v1281, %v1442
      %v1479 = vadd.f32 %v1282, %v1443
      %v1480 = vadd.f32 %v1283, %v1444
      %v1481 = vadd.f32 %v1284, %v1445
      %v1482 = vadd.f32 %v1285, %v1446
      %v1483 = vadd.f32 %v1286, %v1447
      %v1484 = vadd.f32 %v1287, %v1448
      %v1485 = vadd.f32 %v1288, %v1449
      %v1486 = vadd.f32 %v1289, %v1450
      %v1487 = vadd.f32 %v1290, %v1451
      %v1488 = vadd.f32 %v1291, %v1452
      %v1489 = vadd.f32 %v1292, %v1453
      %v1490 = vadd.f32 %v1293, %v1454
      %v1491 = vadd.f32 %v1294, %v1455
      %1492 = vrot.lane.b32.xlu0 %v422, 64
      %v1493 = vpop.permute.xlu0 %1492
      %1494 = vrot.lane.b32.xlu0 %v426, 64
      %v1495 = vpop.permute.xlu0 %1494
      %1496 = vrot.lane.b32.xlu0 %v430, 64
      %v1497 = vpop.permute.xlu0 %1496
      %1498 = vrot.lane.b32.xlu0 %v434, 64
      %v1499 = vpop.permute.xlu0 %1498
      %1500 = vrot.lane.b32.xlu0 %v438, 64
      %v1501 = vpop.permute.xlu0 %1500
      %1502 = vrot.lane.b32.xlu0 %v442, 64
      %v1503 = vpop.permute.xlu0 %1502
      %vm1504 = vcmask 523264
      %v1505 = vsel %vm1504, %v1493, %v1495
      %v1506 = vsel %vm1504, %v1495, %v1497
      %v1507 = vsel %vm1504, %v1497, %v1499
      %v1508 = vsel %vm1504, %v1499, %v1501
      %v1509 = vsel %vm1504, %v1501, %v1503
      %v1517 = vmul.f32 %v512, %v1493
      %v1518 = vmul.f32 %v513, %v1505
      %v1519 = vmul.f32 %v514, %v1506
      %v1520 = vmul.f32 %v515, %v1507
      %v1521 = vmul.f32 %v516, %v1508
      %v1522 = vmul.f32 %v517, %v1509
      %v1523 = vmul.f32 %v518, %v1503
      %v1524 = vmul.f32 %v519, %v1493
      %v1525 = vmul.f32 %v520, %v1505
      %v1526 = vmul.f32 %v521, %v1506
      %v1527 = vmul.f32 %v522, %v1507
      %v1528 = vmul.f32 %v523, %v1508
      %v1529 = vmul.f32 %v524, %v1509
      %v1530 = vmul.f32 %v525, %v1503
      %v1531 = vmul.f32 %v526, %v1493
      %v1532 = vmul.f32 %v527, %v1505
      %v1533 = vmul.f32 %v528, %v1506
      %v1534 = vmul.f32 %v529, %v1507
      %v1535 = vmul.f32 %v530, %v1508
      %v1536 = vmul.f32 %v531, %v1509
      %v1537 = vmul.f32 %v532, %v1503
      %1538 = vset.pattern.permute.xlu0 6
      %1539 = vperm.xlu0 %1538, %v364
      %v1540 = vpop.permute.xlu0 %1539
      %1542 = vset.pattern.permute.xlu0 6
      %1543 = vperm.xlu0 %1542, %v365
      %v1544 = vpop.permute.xlu0 %1543
      %1546 = vset.pattern.permute.xlu0 6
      %1547 = vperm.xlu0 %1546, %v366
      %v1548 = vpop.permute.xlu0 %1547
      %v1550 = vmul.f32 %v1517, %v1540
      %v1551 = vmul.f32 %v1518, %v1540
      %v1552 = vmul.f32 %v1519, %v1540
      %v1553 = vmul.f32 %v1520, %v1540
      %v1554 = vmul.f32 %v1521, %v1540
      %v1555 = vmul.f32 %v1522, %v1540
      %v1556 = vmul.f32 %v1523, %v1540
      %v1557 = vmul.f32 %v1524, %v1544
      %v1558 = vmul.f32 %v1525, %v1544
      %v1559 = vmul.f32 %v1526, %v1544
      %v1560 = vmul.f32 %v1527, %v1544
      %v1561 = vmul.f32 %v1528, %v1544
      %v1562 = vmul.f32 %v1529, %v1544
      %v1563 = vmul.f32 %v1530, %v1544
      %v1564 = vmul.f32 %v1531, %v1548
      %v1565 = vmul.f32 %v1532, %v1548
      %v1566 = vmul.f32 %v1533, %v1548
      %v1567 = vmul.f32 %v1534, %v1548
      %v1568 = vmul.f32 %v1535, %v1548
      %v1569 = vmul.f32 %v1536, %v1548
      %v1570 = vmul.f32 %v1537, %v1548
      %1592 = vrot.lane.b32.xlu0 %v1550, 64
      %v1593 = vpop.permute.xlu0 %1592
      %1594 = vrot.lane.b32.xlu0 %v1551, 64
      %v1595 = vpop.permute.xlu0 %1594
      %1596 = vrot.lane.b32.xlu0 %v1552, 64
      %v1597 = vpop.permute.xlu0 %1596
      %1598 = vrot.lane.b32.xlu0 %v1553, 64
      %v1599 = vpop.permute.xlu0 %1598
      %1600 = vrot.lane.b32.xlu0 %v1554, 64
      %v1601 = vpop.permute.xlu0 %1600
      %1602 = vrot.lane.b32.xlu0 %v1555, 64
      %v1603 = vpop.permute.xlu0 %1602
      %1604 = vrot.lane.b32.xlu0 %v1556, 64
      %v1605 = vpop.permute.xlu0 %1604
      %1606 = vrot.lane.b32.xlu0 %v1557, 64
      %v1607 = vpop.permute.xlu0 %1606
      %1608 = vrot.lane.b32.xlu0 %v1558, 64
      %v1609 = vpop.permute.xlu0 %1608
      %1610 = vrot.lane.b32.xlu0 %v1559, 64
      %v1611 = vpop.permute.xlu0 %1610
      %1612 = vrot.lane.b32.xlu0 %v1560, 64
      %v1613 = vpop.permute.xlu0 %1612
      %1614 = vrot.lane.b32.xlu0 %v1561, 64
      %v1615 = vpop.permute.xlu0 %1614
      %1616 = vrot.lane.b32.xlu0 %v1562, 64
      %v1617 = vpop.permute.xlu0 %1616
      %1618 = vrot.lane.b32.xlu0 %v1563, 64
      %v1619 = vpop.permute.xlu0 %1618
      %1620 = vrot.lane.b32.xlu0 %v1564, 64
      %v1621 = vpop.permute.xlu0 %1620
      %1622 = vrot.lane.b32.xlu0 %v1565, 64
      %v1623 = vpop.permute.xlu0 %1622
      %1624 = vrot.lane.b32.xlu0 %v1566, 64
      %v1625 = vpop.permute.xlu0 %1624
      %1626 = vrot.lane.b32.xlu0 %v1567, 64
      %v1627 = vpop.permute.xlu0 %1626
      %1628 = vrot.lane.b32.xlu0 %v1568, 64
      %v1629 = vpop.permute.xlu0 %1628
      %1630 = vrot.lane.b32.xlu0 %v1569, 64
      %v1631 = vpop.permute.xlu0 %1630
      %1632 = vrot.lane.b32.xlu0 %v1570, 64
      %v1633 = vpop.permute.xlu0 %1632
      %v1634 = vsel %vm1504, %v1593, %v1595
      %v1635 = vsel %vm1504, %v1595, %v1597
      %v1636 = vsel %vm1504, %v1597, %v1599
      %v1637 = vsel %vm1504, %v1599, %v1601
      %v1638 = vsel %vm1504, %v1601, %v1603
      %v1639 = vsel %vm1504, %v1603, %v1605
      %v1640 = vsel %vm1504, %v1607, %v1609
      %v1641 = vsel %vm1504, %v1609, %v1611
      %v1642 = vsel %vm1504, %v1611, %v1613
      %v1643 = vsel %vm1504, %v1613, %v1615
      %v1644 = vsel %vm1504, %v1615, %v1617
      %v1645 = vsel %vm1504, %v1617, %v1619
      %v1646 = vsel %vm1504, %v1621, %v1623
      %v1647 = vsel %vm1504, %v1623, %v1625
      %v1648 = vsel %vm1504, %v1625, %v1627
      %v1649 = vsel %vm1504, %v1627, %v1629
      %v1650 = vsel %vm1504, %v1629, %v1631
      %v1651 = vsel %vm1504, %v1631, %v1633
      %v1670 = vadd.f32 %v1474, %v1634
      %v1671 = vadd.f32 %v1475, %v1635
      %v1672 = vadd.f32 %v1476, %v1636
      %v1673 = vadd.f32 %v1477, %v1637
      %v1674 = vadd.f32 %v1478, %v1638
      %v1675 = vadd.f32 %v1479, %v1639
      %v1676 = vadd.f32 %v1480, %v1640
      %v1677 = vadd.f32 %v1481, %v1641
      %v1678 = vadd.f32 %v1482, %v1642
      %v1679 = vadd.f32 %v1483, %v1643
      %v1680 = vadd.f32 %v1484, %v1644
      %v1681 = vadd.f32 %v1485, %v1645
      %v1682 = vadd.f32 %v1486, %v1646
      %v1683 = vadd.f32 %v1487, %v1647
      %v1684 = vadd.f32 %v1488, %v1648
      %v1685 = vadd.f32 %v1489, %v1649
      %v1686 = vadd.f32 %v1490, %v1650
      %v1687 = vadd.f32 %v1491, %v1651
      %1688 = vset.pattern.permute.xlu0 7
      %1689 = vperm.xlu0 %1688, %v364
      %v1690 = vpop.permute.xlu0 %1689
      %1692 = vset.pattern.permute.xlu0 7
      %1693 = vperm.xlu0 %1692, %v365
      %v1694 = vpop.permute.xlu0 %1693
      %1696 = vset.pattern.permute.xlu0 7
      %1697 = vperm.xlu0 %1696, %v366
      %v1698 = vpop.permute.xlu0 %1697
      %v1700 = vmul.f32 %v512, %v1690
      %v1701 = vmul.f32 %v513, %v1690
      %v1702 = vmul.f32 %v514, %v1690
      %v1703 = vmul.f32 %v515, %v1690
      %v1704 = vmul.f32 %v516, %v1690
      %v1705 = vmul.f32 %v517, %v1690
      %v1706 = vmul.f32 %v518, %v1690
      %v1707 = vmul.f32 %v519, %v1694
      %v1708 = vmul.f32 %v520, %v1694
      %v1709 = vmul.f32 %v521, %v1694
      %v1710 = vmul.f32 %v522, %v1694
      %v1711 = vmul.f32 %v523, %v1694
      %v1712 = vmul.f32 %v524, %v1694
      %v1713 = vmul.f32 %v525, %v1694
      %v1714 = vmul.f32 %v526, %v1698
      %v1715 = vmul.f32 %v527, %v1698
      %v1716 = vmul.f32 %v528, %v1698
      %v1717 = vmul.f32 %v529, %v1698
      %v1718 = vmul.f32 %v530, %v1698
      %v1719 = vmul.f32 %v531, %v1698
      %v1720 = vmul.f32 %v532, %v1698
      %1742 = vrot.lane.b32.xlu0 %v1700, 63
      %v1743 = vpop.permute.xlu0 %1742
      %1744 = vrot.lane.b32.xlu0 %v1701, 63
      %v1745 = vpop.permute.xlu0 %1744
      %1746 = vrot.lane.b32.xlu0 %v1702, 63
      %v1747 = vpop.permute.xlu0 %1746
      %1748 = vrot.lane.b32.xlu0 %v1703, 63
      %v1749 = vpop.permute.xlu0 %1748
      %1750 = vrot.lane.b32.xlu0 %v1704, 63
      %v1751 = vpop.permute.xlu0 %1750
      %1752 = vrot.lane.b32.xlu0 %v1705, 63
      %v1753 = vpop.permute.xlu0 %1752
      %1754 = vrot.lane.b32.xlu0 %v1706, 63
      %v1755 = vpop.permute.xlu0 %1754
      %1756 = vrot.lane.b32.xlu0 %v1707, 63
      %v1757 = vpop.permute.xlu0 %1756
      %1758 = vrot.lane.b32.xlu0 %v1708, 63
      %v1759 = vpop.permute.xlu0 %1758
      %1760 = vrot.lane.b32.xlu0 %v1709, 63
      %v1761 = vpop.permute.xlu0 %1760
      %1762 = vrot.lane.b32.xlu0 %v1710, 63
      %v1763 = vpop.permute.xlu0 %1762
      %1764 = vrot.lane.b32.xlu0 %v1711, 63
      %v1765 = vpop.permute.xlu0 %1764
      %1766 = vrot.lane.b32.xlu0 %v1712, 63
      %v1767 = vpop.permute.xlu0 %1766
      %1768 = vrot.lane.b32.xlu0 %v1713, 63
      %v1769 = vpop.permute.xlu0 %1768
      %1770 = vrot.lane.b32.xlu0 %v1714, 63
      %v1771 = vpop.permute.xlu0 %1770
      %1772 = vrot.lane.b32.xlu0 %v1715, 63
      %v1773 = vpop.permute.xlu0 %1772
      %1774 = vrot.lane.b32.xlu0 %v1716, 63
      %v1775 = vpop.permute.xlu0 %1774
      %1776 = vrot.lane.b32.xlu0 %v1717, 63
      %v1777 = vpop.permute.xlu0 %1776
      %1778 = vrot.lane.b32.xlu0 %v1718, 63
      %v1779 = vpop.permute.xlu0 %1778
      %1780 = vrot.lane.b32.xlu0 %v1719, 63
      %v1781 = vpop.permute.xlu0 %1780
      %1782 = vrot.lane.b32.xlu0 %v1720, 63
      %v1783 = vpop.permute.xlu0 %1782
      %vm1784 = vcmask 515072
      %v1785 = vsel %vm1784, %v1743, %v1745
      %v1786 = vsel %vm1784, %v1745, %v1747
      %v1787 = vsel %vm1784, %v1747, %v1749
      %v1788 = vsel %vm1784, %v1749, %v1751
      %v1789 = vsel %vm1784, %v1751, %v1753
      %v1790 = vsel %vm1784, %v1753, %v1755
      %v1791 = vsel %vm1784, %v1757, %v1759
      %v1792 = vsel %vm1784, %v1759, %v1761
      %v1793 = vsel %vm1784, %v1761, %v1763
      %v1794 = vsel %vm1784, %v1763, %v1765
      %v1795 = vsel %vm1784, %v1765, %v1767
      %v1796 = vsel %vm1784, %v1767, %v1769
      %v1797 = vsel %vm1784, %v1771, %v1773
      %v1798 = vsel %vm1784, %v1773, %v1775
      %v1799 = vsel %vm1784, %v1775, %v1777
      %v1800 = vsel %vm1784, %v1777, %v1779
      %v1801 = vsel %vm1784, %v1779, %v1781
      %v1802 = vsel %vm1784, %v1781, %v1783
      %v1821 = vadd.f32 %v1670, %v1785
      %v1822 = vadd.f32 %v1671, %v1786
      %v1823 = vadd.f32 %v1672, %v1787
      %v1824 = vadd.f32 %v1673, %v1788
      %v1825 = vadd.f32 %v1674, %v1789
      %v1826 = vadd.f32 %v1675, %v1790
      %v1827 = vadd.f32 %v1676, %v1791
      %v1828 = vadd.f32 %v1677, %v1792
      %v1829 = vadd.f32 %v1678, %v1793
      %v1830 = vadd.f32 %v1679, %v1794
      %v1831 = vadd.f32 %v1680, %v1795
      %v1832 = vadd.f32 %v1681, %v1796
      %v1833 = vadd.f32 %v1682, %v1797
      %v1834 = vadd.f32 %v1683, %v1798
      %v1835 = vadd.f32 %v1684, %v1799
      %v1836 = vadd.f32 %v1685, %v1800
      %v1837 = vadd.f32 %v1686, %v1801
      %v1838 = vadd.f32 %v1687, %v1802
      %1839 = vrot.lane.b32.xlu0 %v717, 66
      %v1840 = vpop.permute.xlu0 %1839
      %1841 = vrot.lane.b32.xlu0 %v721, 66
      %v1842 = vpop.permute.xlu0 %1841
      %1843 = vrot.lane.b32.xlu0 %v725, 66
      %v1844 = vpop.permute.xlu0 %1843
      %1845 = vrot.lane.b32.xlu0 %v729, 66
      %v1846 = vpop.permute.xlu0 %1845
      %1847 = vrot.lane.b32.xlu0 %v733, 66
      %v1848 = vpop.permute.xlu0 %1847
      %1849 = vrot.lane.b32.xlu0 %v737, 66
      %v1850 = vpop.permute.xlu0 %1849
      %vm1851 = vcmask 539648
      %v1852 = vsel %vm1851, %v1840, %v1842
      %v1853 = vsel %vm1851, %v1842, %v1844
      %v1854 = vsel %vm1851, %v1844, %v1846
      %v1855 = vsel %vm1851, %v1846, %v1848
      %v1856 = vsel %vm1851, %v1848, %v1850
      %v1864 = vmul.f32 %v512, %v1840
      %v1865 = vmul.f32 %v513, %v1852
      %v1866 = vmul.f32 %v514, %v1853
      %v1867 = vmul.f32 %v515, %v1854
      %v1868 = vmul.f32 %v516, %v1855
      %v1869 = vmul.f32 %v517, %v1856
      %v1870 = vmul.f32 %v518, %v1850
      %v1871 = vmul.f32 %v519, %v1840
      %v1872 = vmul.f32 %v520, %v1852
      %v1873 = vmul.f32 %v521, %v1853
      %v1874 = vmul.f32 %v522, %v1854
      %v1875 = vmul.f32 %v523, %v1855
      %v1876 = vmul.f32 %v524, %v1856
      %v1877 = vmul.f32 %v525, %v1850
      %v1878 = vmul.f32 %v526, %v1840
      %v1879 = vmul.f32 %v527, %v1852
      %v1880 = vmul.f32 %v528, %v1853
      %v1881 = vmul.f32 %v529, %v1854
      %v1882 = vmul.f32 %v530, %v1855
      %v1883 = vmul.f32 %v531, %v1856
      %v1884 = vmul.f32 %v532, %v1850
      %1885 = vset.pattern.permute.xlu0 8
      %1886 = vperm.xlu0 %1885, %v364
      %v1887 = vpop.permute.xlu0 %1886
      %1889 = vset.pattern.permute.xlu0 8
      %1890 = vperm.xlu0 %1889, %v365
      %v1891 = vpop.permute.xlu0 %1890
      %1893 = vset.pattern.permute.xlu0 8
      %1894 = vperm.xlu0 %1893, %v366
      %v1895 = vpop.permute.xlu0 %1894
      %v1897 = vmul.f32 %v1864, %v1887
      %v1898 = vmul.f32 %v1865, %v1887
      %v1899 = vmul.f32 %v1866, %v1887
      %v1900 = vmul.f32 %v1867, %v1887
      %v1901 = vmul.f32 %v1868, %v1887
      %v1902 = vmul.f32 %v1869, %v1887
      %v1903 = vmul.f32 %v1870, %v1887
      %v1904 = vmul.f32 %v1871, %v1891
      %v1905 = vmul.f32 %v1872, %v1891
      %v1906 = vmul.f32 %v1873, %v1891
      %v1907 = vmul.f32 %v1874, %v1891
      %v1908 = vmul.f32 %v1875, %v1891
      %v1909 = vmul.f32 %v1876, %v1891
      %v1910 = vmul.f32 %v1877, %v1891
      %v1911 = vmul.f32 %v1878, %v1895
      %v1912 = vmul.f32 %v1879, %v1895
      %v1913 = vmul.f32 %v1880, %v1895
      %v1914 = vmul.f32 %v1881, %v1895
      %v1915 = vmul.f32 %v1882, %v1895
      %v1916 = vmul.f32 %v1883, %v1895
      %v1917 = vmul.f32 %v1884, %v1895
      %1939 = vrot.lane.b32.xlu0 %v1897, 62
      %v1940 = vpop.permute.xlu0 %1939
      %1941 = vrot.lane.b32.xlu0 %v1898, 62
      %v1942 = vpop.permute.xlu0 %1941
      %1943 = vrot.lane.b32.xlu0 %v1899, 62
      %v1944 = vpop.permute.xlu0 %1943
      %1945 = vrot.lane.b32.xlu0 %v1900, 62
      %v1946 = vpop.permute.xlu0 %1945
      %1947 = vrot.lane.b32.xlu0 %v1901, 62
      %v1948 = vpop.permute.xlu0 %1947
      %1949 = vrot.lane.b32.xlu0 %v1902, 62
      %v1950 = vpop.permute.xlu0 %1949
      %1951 = vrot.lane.b32.xlu0 %v1903, 62
      %v1952 = vpop.permute.xlu0 %1951
      %1953 = vrot.lane.b32.xlu0 %v1904, 62
      %v1954 = vpop.permute.xlu0 %1953
      %1955 = vrot.lane.b32.xlu0 %v1905, 62
      %v1956 = vpop.permute.xlu0 %1955
      %1957 = vrot.lane.b32.xlu0 %v1906, 62
      %v1958 = vpop.permute.xlu0 %1957
      %1959 = vrot.lane.b32.xlu0 %v1907, 62
      %v1960 = vpop.permute.xlu0 %1959
      %1961 = vrot.lane.b32.xlu0 %v1908, 62
      %v1962 = vpop.permute.xlu0 %1961
      %1963 = vrot.lane.b32.xlu0 %v1909, 62
      %v1964 = vpop.permute.xlu0 %1963
      %1965 = vrot.lane.b32.xlu0 %v1910, 62
      %v1966 = vpop.permute.xlu0 %1965
      %1967 = vrot.lane.b32.xlu0 %v1911, 62
      %v1968 = vpop.permute.xlu0 %1967
      %1969 = vrot.lane.b32.xlu0 %v1912, 62
      %v1970 = vpop.permute.xlu0 %1969
      %1971 = vrot.lane.b32.xlu0 %v1913, 62
      %v1972 = vpop.permute.xlu0 %1971
      %1973 = vrot.lane.b32.xlu0 %v1914, 62
      %v1974 = vpop.permute.xlu0 %1973
      %1975 = vrot.lane.b32.xlu0 %v1915, 62
      %v1976 = vpop.permute.xlu0 %1975
      %1977 = vrot.lane.b32.xlu0 %v1916, 62
      %v1978 = vpop.permute.xlu0 %1977
      %1979 = vrot.lane.b32.xlu0 %v1917, 62
      %v1980 = vpop.permute.xlu0 %1979
      %vm1981 = vcmask 506880
      %v1982 = vsel %vm1981, %v1940, %v1942
      %v1983 = vsel %vm1981, %v1942, %v1944
      %v1984 = vsel %vm1981, %v1944, %v1946
      %v1985 = vsel %vm1981, %v1946, %v1948
      %v1986 = vsel %vm1981, %v1948, %v1950
      %v1987 = vsel %vm1981, %v1950, %v1952
      %v1988 = vsel %vm1981, %v1954, %v1956
      %v1989 = vsel %vm1981, %v1956, %v1958
      %v1990 = vsel %vm1981, %v1958, %v1960
      %v1991 = vsel %vm1981, %v1960, %v1962
      %v1992 = vsel %vm1981, %v1962, %v1964
      %v1993 = vsel %vm1981, %v1964, %v1966
      %v1994 = vsel %vm1981, %v1968, %v1970
      %v1995 = vsel %vm1981, %v1970, %v1972
      %v1996 = vsel %vm1981, %v1972, %v1974
      %v1997 = vsel %vm1981, %v1974, %v1976
      %v1998 = vsel %vm1981, %v1976, %v1978
      %v1999 = vsel %vm1981, %v1978, %v1980
      %v2018 = vadd.f32 %v1821, %v1982
      %v2019 = vadd.f32 %v1822, %v1983
      %v2020 = vadd.f32 %v1823, %v1984
      %v2021 = vadd.f32 %v1824, %v1985
      %v2022 = vadd.f32 %v1825, %v1986
      %v2023 = vadd.f32 %v1826, %v1987
      %v2024 = vadd.f32 %v1827, %v1988
      %v2025 = vadd.f32 %v1828, %v1989
      %v2026 = vadd.f32 %v1829, %v1990
      %v2027 = vadd.f32 %v1830, %v1991
      %v2028 = vadd.f32 %v1831, %v1992
      %v2029 = vadd.f32 %v1832, %v1993
      %v2030 = vadd.f32 %v1833, %v1994
      %v2031 = vadd.f32 %v1834, %v1995
      %v2032 = vadd.f32 %v1835, %v1996
      %v2033 = vadd.f32 %v1836, %v1997
      %v2034 = vadd.f32 %v1837, %v1998
      %v2035 = vadd.f32 %v1838, %v1999
      %v2036 = vld [vmem:[%s2] sm:$0xf]
      %v2037 = vld [vmem:[%s2 + $0x4] sm:$0xf]
      %v2038 = vld [vmem:[%s2 + $0x8] sm:$0xf]
      %v2039 = vpack.c.bf16 %v2024, %v2018
      %v2040 = vpack.c.bf16 %v2025, %v2019
      %v2041 = vpack.c.bf16 %v2026, %v2020
      %v2042 = vpack.c.bf16 %v2027, %v2021
      %v2043 = vpack.c.bf16 %v2028, %v2022
      %v2044 = vpack.c.bf16 %v2029, %v2023
      %v2045 = vpack.c.bf16 %v2030, %v2030
      %v2046 = vpack.c.bf16 %v2031, %v2031
      %v2047 = vpack.c.bf16 %v2032, %v2032
      %v2048 = vpack.c.bf16 %v2033, %v2033
      %v2049 = vpack.c.bf16 %v2034, %v2034
      %v2050 = vpack.c.bf16 %v2035, %v2035
      %v2051 = vld [vmem:[%s3] sm:$0xff]
      %v2052 = vld [vmem:[%s3 + $0x8] sm:$0xff]
      %v2053 = vld [vmem:[%s3 + $0x10] sm:$0xff]
      %2055 = vset.pattern.permute.xlu0 0
      %2056 = vperm.xlu0 %2055, %v2051
      %v2057 = vpop.permute.xlu0 %2056
      %2060 = vset.pattern.permute.xlu0 0
      %2061 = vperm.xlu0 %2060, %v2052
      %v2062 = vpop.permute.xlu0 %2061
      %2065 = vset.pattern.permute.xlu0 0
      %2066 = vperm.xlu0 %2065, %v2053
      %v2067 = vpop.permute.xlu0 %2066
      %v2072 = vunpack.c.l.b16 %v2036
      %v2073 = vunpack.c.l.b16 %v2037
      %v2074 = vunpack.c.l.b16 %v2038
      %v2075 = vpack.c.b16 %v2073, %v2072
      %v2076 = vpack.c.b16 %v2074, %v2074
      %vm2077 = vcmask 195584
      %v2079 = vsel %vm2077, %v2075, 0
      %v2082 = vsel %vm2077, %v2076, 0
      %vm2084 = vcmask 1043456
      %v2086 = vsel %vm2084, %v2045, 0
      %v2089 = vsel %vm2084, %v2046, 0
      %v2092 = vsel %vm2084, %v2047, 0
      %v2095 = vsel %vm2084, %v2048, 0
      %v2098 = vsel %vm2084, %v2049, 0
      %v2101 = vsel %vm2084, %v2050, 0
      %2103 = vmatprep.subr.bf16.mxu0 %v2040
      %2104 = vmatpush1.bf16.msra.mxu0 %v2039
      %2105 = vmatprep.subr.bf16.mxu0 %v2089
      %2106 = vmatpush1.bf16.msra.mxu0 %v2086
      %2107 = vmatprep.subr.bf16.mxu0 0
      %2108 = vmatpush1.bf16.msra.mxu0 0
      %2109 = vmatprep.subr.bf16.mxu0 0
      %2110 = vmatpush1.bf16.msra.mxu0 0
      %2111 = vmatprep.subr.bf16.mxu0 0
      %2112 = vmatpush1.bf16.msra.mxu0 0
      %2113 = vmatprep.subr.bf16.mxu0 0
      %2114 = vmatpush1.bf16.msra.mxu0 0
      %2115 = vmatprep.subr.bf16.mxu0 0
      %2116 = vmatpush1.bf16.msra.mxu0 0
      %2117 = vmatprep.subr.bf16.mxu0 0
      %2118 = vmatpush1.bf16.msra.mxu0 0
      %2119 = vmatprep.subr.bf16.mxu0 0
      %2120 = vmatpush1.bf16.msra.mxu0 0
      %2121 = vmatprep.subr.bf16.mxu0 0
      %2122 = vmatpush1.bf16.msra.mxu0 0
      %2123 = vmatprep.subr.bf16.mxu0 0
      %2124 = vmatpush1.bf16.msra.mxu0 0
      %2125 = vmatprep.subr.bf16.mxu0 0
      %2126 = vmatpush1.bf16.msra.mxu0 0
      %2127 = vmatprep.subr.bf16.mxu0 0
      %2128 = vmatpush1.bf16.msra.mxu0 0
      %2129 = vmatprep.subr.bf16.mxu0 0
      %2130 = vmatpush1.bf16.msra.mxu0 0
      %2131 = vmatprep.subr.bf16.mxu0 0
      %2132 = vmatpush1.bf16.msra.mxu0 0
      %2133 = vmatprep.subr.bf16.mxu0 0
      %2134 = vmatpush1.bf16.msra.mxu0 0
      %2135 = vmatprep.mubr.bf16.mxu0 0
      %2136 = vmatmul.mubr.bf16.gmra.mrb[0].mxu0 %v2079
      %v2137 = vpop.f32.mrb[0].mxu0
      %v2138 = vadd.f32 %v2057, %v2137
      %v2139 = vpop.f32.mrb[0].mxu0
      %v2140 = vadd.f32 %v2057, %v2139
      %v2141 = vpop.f32.mrb[0].mxu0
      %v2142 = vadd.f32 %v2062, %v2141
      %v2143 = vpop.f32.mrb[0].mxu0
      %v2144 = vadd.f32 %v2062, %v2143
      %2145 = vmatprep.mubr.bf16.mxu0 0
      %2146 = vmatmul.mubr.bf16.gmra.mrb[0].mxu0 %v2082
      %v2147 = vpop.f32.mrb[0].mxu0
      %v2148 = vadd.f32 %v2067, %v2147
      %v2149 = vpop.f32.mrb[0].mxu0
      %v2150 = vadd.f32 %v2067, %v2149
      %v2151 = vpop.f32.mrb[0].mxu0
      %v2152 = vpop.f32.mrb[0].mxu0
      %2153 = vdwg.mxu0
      %2154 = vmatprep.subr.bf16.mxu0 %v2042
      %2155 = vmatpush1.bf16.msra.mxu0 %v2041
      %2156 = vmatprep.subr.bf16.mxu0 %v2095
      %2157 = vmatpush1.bf16.msra.mxu0 %v2092
      %2158 = vmatprep.subr.bf16.mxu0 0
      %2159 = vmatpush1.bf16.msra.mxu0 0
      %2160 = vmatprep.subr.bf16.mxu0 0
      %2161 = vmatpush1.bf16.msra.mxu0 0
      %2162 = vmatprep.subr.bf16.mxu0 0
      %2163 = vmatpush1.bf16.msra.mxu0 0
      %2164 = vmatprep.subr.bf16.mxu0 0
      %2165 = vmatpush1.bf16.msra.mxu0 0
      %2166 = vmatprep.subr.bf16.mxu0 0
      %2167 = vmatpush1.bf16.msra.mxu0 0
      %2168 = vmatprep.subr.bf16.mxu0 0
      %2169 = vmatpush1.bf16.msra.mxu0 0
      %2170 = vmatprep.subr.bf16.mxu0 0
      %2171 = vmatpush1.bf16.msra.mxu0 0
      %2172 = vmatprep.subr.bf16.mxu0 0
      %2173 = vmatpush1.bf16.msra.mxu0 0
      %2174 = vmatprep.subr.bf16.mxu0 0
      %2175 = vmatpush1.bf16.msra.mxu0 0
      %2176 = vmatprep.subr.bf16.mxu0 0
      %2177 = vmatpush1.bf16.msra.mxu0 0
      %2178 = vmatprep.subr.bf16.mxu0 0
      %2179 = vmatpush1.bf16.msra.mxu0 0
      %2180 = vmatprep.subr.bf16.mxu0 0
      %2181 = vmatpush1.bf16.msra.mxu0 0
      %2182 = vmatprep.subr.bf16.mxu0 0
      %2183 = vmatpush1.bf16.msra.mxu0 0
      %2184 = vmatprep.subr.bf16.mxu0 0
      %2185 = vmatpush1.bf16.msra.mxu0 0
      %2186 = vmatprep.mubr.bf16.mxu0 0
      %2187 = vmatmul.mubr.bf16.gmra.mrb[0].mxu0 %v2079
      %v2188 = vpop.f32.mrb[0].mxu0
      %v2189 = vadd.f32 %v2057, %v2188
      %v2190 = vpop.f32.mrb[0].mxu0
      %v2191 = vadd.f32 %v2057, %v2190
      %v2192 = vpop.f32.mrb[0].mxu0
      %v2193 = vadd.f32 %v2062, %v2192
      %v2194 = vpop.f32.mrb[0].mxu0
      %v2195 = vadd.f32 %v2062, %v2194
      %2196 = vmatprep.mubr.bf16.mxu0 0
      %2197 = vmatmul.mubr.bf16.gmra.mrb[0].mxu0 %v2082
      %v2198 = vpop.f32.mrb[0].mxu0
      %v2199 = vadd.f32 %v2067, %v2198
      %v2200 = vpop.f32.mrb[0].mxu0
      %v2201 = vadd.f32 %v2067, %v2200
      %v2202 = vpop.f32.mrb[0].mxu0
      %v2203 = vpop.f32.mrb[0].mxu0
      %2204 = vdwg.mxu0
      %2205 = vmatprep.subr.bf16.mxu0 %v2044
      %2206 = vmatpush1.bf16.msra.mxu0 %v2043
      %2207 = vmatprep.subr.bf16.mxu0 %v2101
      %2208 = vmatpush1.bf16.msra.mxu0 %v2098
      %2209 = vmatprep.subr.bf16.mxu0 0
      %2210 = vmatpush1.bf16.msra.mxu0 0
      %2211 = vmatprep.subr.bf16.mxu0 0
      %2212 = vmatpush1.bf16.msra.mxu0 0
      %2213 = vmatprep.subr.bf16.mxu0 0
      %2214 = vmatpush1.bf16.msra.mxu0 0
      %2215 = vmatprep.subr.bf16.mxu0 0
      %2216 = vmatpush1.bf16.msra.mxu0 0
      %2217 = vmatprep.subr.bf16.mxu0 0
      %2218 = vmatpush1.bf16.msra.mxu0 0
      %2219 = vmatprep.subr.bf16.mxu0 0
      %2220 = vmatpush1.bf16.msra.mxu0 0
      %2221 = vmatprep.subr.bf16.mxu0 0
      %2222 = vmatpush1.bf16.msra.mxu0 0
      %2223 = vmatprep.subr.bf16.mxu0 0
      %2224 = vmatpush1.bf16.msra.mxu0 0
      %2225 = vmatprep.subr.bf16.mxu0 0
      %2226 = vmatpush1.bf16.msra.mxu0 0
      %2227 = vmatprep.subr.bf16.mxu0 0
      %2228 = vmatpush1.bf16.msra.mxu0 0
      %2229 = vmatprep.subr.bf16.mxu0 0
      %2230 = vmatpush1.bf16.msra.mxu0 0
      %2231 = vmatprep.subr.bf16.mxu0 0
      %2232 = vmatpush1.bf16.msra.mxu0 0
      %2233 = vmatprep.subr.bf16.mxu0 0
      %2234 = vmatpush1.bf16.msra.mxu0 0
      %2235 = vmatprep.subr.bf16.mxu0 0
      %2236 = vmatpush1.bf16.msra.mxu0 0
      %2237 = vmatprep.mubr.bf16.mxu0 0
      %2238 = vmatmul.mubr.bf16.gmra.mrb[0].mxu0 %v2079
      %v2239 = vpop.f32.mrb[0].mxu0
      %v2240 = vadd.f32 %v2057, %v2239
      %v2241 = vpop.f32.mrb[0].mxu0
      %v2242 = vadd.f32 %v2057, %v2241
      %v2243 = vpop.f32.mrb[0].mxu0
      %v2244 = vadd.f32 %v2062, %v2243
      %v2245 = vpop.f32.mrb[0].mxu0
      %v2246 = vadd.f32 %v2062, %v2245
      %2247 = vmatprep.mubr.bf16.mxu0 0
      %2248 = vmatmul.mubr.bf16.gmra.mrb[0].mxu0 %v2082
      %v2249 = vpop.f32.mrb[0].mxu0
      %v2250 = vadd.f32 %v2067, %v2249
      %v2251 = vpop.f32.mrb[0].mxu0
      %v2252 = vadd.f32 %v2067, %v2251
      %v2253 = vpop.f32.mrb[0].mxu0
      %v2254 = vpop.f32.mrb[0].mxu0
      %2255 = vdwg.mxu0
      %2256 = vst [vmem:[%s224] sm:$0xff] %v2138
      %2257 = vst [vmem:[%s224 + $0x8] sm:$0xff] %v2140
      %2258 = vst [vmem:[%s224 + $0x10] sm:$0xff] %v2189
      %2259 = vst [vmem:[%s224 + $0x18] sm:$0xff] %v2191
      %2260 = vst [vmem:[%s224 + $0x20] sm:$0xff] %v2240
      %2261 = vst [vmem:[%s224 + $0x28] sm:$0xff] %v2242
      %2262 = vst [vmem:[%s224 + $0x30] sm:$0xff] %v2142
      %2263 = vst [vmem:[%s224 + $0x38] sm:$0xff] %v2144
      %2264 = vst [vmem:[%s224 + $0x40] sm:$0xff] %v2193
      %2265 = vst [vmem:[%s224 + $0x48] sm:$0xff] %v2195
      %2266 = vst [vmem:[%s224 + $0x50] sm:$0xff] %v2244
      %2267 = vst [vmem:[%s224 + $0x58] sm:$0xff] %v2246
      %2268 = vst [vmem:[%s224 + $0x60] sm:$0xff] %v2148
      %2269 = vst [vmem:[%s224 + $0x68] sm:$0xff] %v2150
      %2270 = vst [vmem:[%s224 + $0x70] sm:$0xff] %v2199
      %2271 = vst [vmem:[%s224 + $0x78] sm:$0xff] %v2201
      %2272 = vst [vmem:[%s224 + $0x80] sm:$0xff] %v2250
      %2273 = vst [vmem:[%s224 + $0x88] sm:$0xff] %v2252
      %p2274 = scmp.lt.s32.totalorder %s16, 1
      %s2275 = scalar_select %p2274, %s16, 1
      %s2276 = smul.addr %s2275, 18
      %s2277 = smul.addr %s2276, 8
      %s2278 = scalar_lea.vmem %s5, %s2277
      // Predicated region
      $region41: #{separable_conv_block.1} parent=39 // pred_check
        %p2279 = pneg %p144
      $region42: #{separable_conv_block.1} parent=39 // pred_check_branch
        %2281 = sbr.rel (%p2279) target = $region44
      $region43: #{separable_conv_block.1} parent=39 // pred_region
        _
      $region44: #{separable_conv_block.1} parent=39 // pred_fallthru
        _
    $region40: #{separable_conv_block.1} parent=5 // pred_fallthru
      _
    %p2282 = scmp.le.s32.totalorder 2, %s11
    // Predicated region
    $region45: #{separable_conv_block.1} parent=5 // pred_check
      %p2283 = pneg %p2282
    $region46: #{separable_conv_block.1} parent=5 // pred_check_branch
      %2285 = sbr.rel (%p2283) target = $region48
    $region47: #{separable_conv_block.1} parent=5 // pred_region
      %s2286 = ssub.s32 %s11, 2
      // Predicated region
      $region49: #{separable_conv_block.1} parent=47 // pred_check
        %p2287 = pneg %p150
      $region50: #{separable_conv_block.1} parent=47 // pred_check_branch
        %2289 = sbr.rel (%p2287) target = $region52
      $region51: #{separable_conv_block.1} parent=47 // pred_region
        %p2290 = scmp.lt.s32.totalorder %s17, 1
        %s2291 = scalar_select %p2290, %s17, 1
        %s2292 = smul.addr %s2291, 18
        %s2293 = smul.addr %s2292, 8
        %s2294 = scalar_lea.vmem %s5, %s2293
      $region52: #{separable_conv_block.1} parent=47 // pred_fallthru
        _
    $region48: #{separable_conv_block.1} parent=5 // pred_fallthru
      _
  $region6: #{separable_conv_block.1} parent=0 // loop_footer
    %s15 = sadd.s32 1, %s11
  $region7: #{separable_conv_block.1} parent=0 // loop_footer_branch
    %10 = sbr.rel target = $region3
  $region8: #{separable_conv_block.1} parent=0 // loop_exit
    _

</llo_original>
